<compile_context>
chip_gen: v6e
topology: v6e:2x2x1
jax: 0.10.0
libtpu: 0.0.40
codegen_flags: <defaults>
</compile_context>

<pallas_src>
import functools

import jax
import jax.numpy as jnp
from jax.experimental import pallas as pl
from jax.experimental.pallas import tpu as pltpu

EPS = 1e-5  # PyTorch InstanceNorm2d default


def _round_up(x, m):
    return (x + m - 1) // m * m


# ---------------------------------------------------------------------------
# Wrapper-side glue: combined (align_corners bilinear x2 + ReflectionPad(1))
# as one small dense row operator per axis -> two XLA matmuls, one intermediate.
# ---------------------------------------------------------------------------
def _interp_pad_matrix(size_in, size_out):
    """(size_out + 2, size_in) operator: bilinear x2 (align_corners) + reflect pad 1."""
    ys = jnp.arange(size_out, dtype=jnp.float32) * (size_in - 1) / (size_out - 1)
    y0 = jnp.clip(jnp.floor(ys).astype(jnp.int32), 0, size_in - 1)
    y1 = jnp.minimum(y0 + 1, size_in - 1)
    wy = ys - y0.astype(jnp.float32)
    u = (jax.nn.one_hot(y0, size_in, dtype=jnp.float32) * (1.0 - wy)[:, None]
         + jax.nn.one_hot(y1, size_in, dtype=jnp.float32) * wy[:, None])
    # ReflectionPad2d(1): row -1 reflects to 1, row size_out reflects to size_out-2.
    idx = jnp.concatenate([
        jnp.array([1], jnp.int32),
        jnp.arange(size_out, dtype=jnp.int32),
        jnp.array([size_out - 2], jnp.int32),
    ])
    return u[idx]


# ---------------------------------------------------------------------------
# Pallas kernel: fused reflect-pad 3x3 conv (9 shifted tap matmuls, bf16 -> f32)
# + bias + masked two-pass instance norm + affine + ReLU, lane-dense slab store.
# ---------------------------------------------------------------------------
def _upconv_kernel(wp, wo, x_ref, w_ref, p_ref, m_ref, o_ref):
    # x_ref: (Cin, L_in)    bf16  flat upsampled+padded slab, row-major (Hp, Wp) on lanes
    # w_ref: (9, Cout, Cin) bf16  conv taps, tap index = kh*3 + kw
    # p_ref: (Cout, 4)      f32   [bias, gamma, beta, 0]
    # m_ref: (1, Lout)      f32   1.0 on valid lanes (col < Wo within each Wp period)
    # o_ref: (Cout, Lout)   f32   Lout = Ho * Wp (wrapper crops the 2 junk cols/row)
    cout, lout = o_ref.shape
    ho = lout // wp
    inv_n = 1.0 / float(ho * wo)

    xv = x_ref[...]                                        # (Cin, L_in) bf16
    acc = jnp.zeros((cout, lout), jnp.float32)
    for kh in range(3):                                    # static 3x3 tap loop (unrolled)
        for kw in range(3):
            shift = kh * wp + kw                           # static lane shift
            rhs = xv[:, shift:shift + lout]                # (Cin, Lout) bf16
            acc = acc + jnp.dot(w_ref[kh * 3 + kw], rhs,
                                preferred_element_type=jnp.float32)

    pv = p_ref[...]                                        # (Cout, 4) f32
    bias, gamma, beta = pv[:, 0:1], pv[:, 1:2], pv[:, 2:3]
    acc = acc + bias

    # Instance norm over valid lanes only; centered two-pass stats (no cancellation).
    mask = m_ref[...]                                      # (1, Lout)
    mean = jnp.sum(acc * mask, axis=1, keepdims=True) * inv_n          # (Cout, 1)
    cen = (acc - mean) * mask
    var = jnp.sum(cen * cen, axis=1, keepdims=True) * inv_n            # (Cout, 1)
    scale = jax.lax.rsqrt(var + EPS) * gamma
    y = (acc - mean) * scale + beta
    o_ref[...] = jnp.maximum(y, 0.0).astype(o_ref.dtype)   # lane-dense 2-D slab store


def upconv_block(x_nchw, w_oihw, bias, gamma, beta, *, stream_dtype=jnp.bfloat16):
    """Forward of UpConvBlock.  x_nchw: (N, Cin, H, W) -> (N, Cout, 2H, 2W)."""
    n, cin, h, w = x_nchw.shape
    cout = w_oihw.shape[0]
    ho, wo = 2 * h, 2 * w
    hp, wp = ho + 2, wo + 2
    lout = ho * wp                        # lane-dense output slab (2 junk cols per row)
    l_in = _round_up(hp * wp + 2, 128)    # room for the max tap shift 2*wp + 2

    x = x_nchw.astype(jnp.float32)
    a = _interp_pad_matrix(h, ho)         # (Hp, H)
    b = _interp_pad_matrix(w, wo)         # (Wp, W)
    # Upsample + reflect-pad as two small matmuls; single HBM intermediate.
    t = jnp.einsum('nchw,jw->nchj', x, b)            # (N, Cin, H, Wp)
    xpad = jnp.einsum('ih,nchj->ncij', a, t)         # (N, Cin, Hp, Wp)
    x_slab = xpad.reshape(n, cin, hp * wp)
    x_slab = jnp.pad(x_slab, ((0, 0), (0, 0), (0, l_in - hp * wp)))
    x_slab = x_slab.astype(stream_dtype)             # bf16 stream to the kernel

    # Conv taps (kh, kw) -> (9, Cout, Cin); merged norm params; valid-lane mask.
    w9 = jnp.transpose(w_oihw.astype(jnp.float32), (2, 3, 0, 1)).reshape(9, cout, cin)
    w9 = w9.astype(stream_dtype)
    params = jnp.stack([bias, gamma, beta, jnp.zeros_like(bias)],
                       axis=1).astype(jnp.float32)                      # (Cout, 4)
    mask = (jnp.arange(lout, dtype=jnp.int32) % wp < wo)
    mask = mask.astype(jnp.float32).reshape(1, lout)

    kernel = functools.partial(_upconv_kernel, wp, wo)
    out = pl.pallas_call(
        kernel,
        out_shape=jax.ShapeDtypeStruct((n, cout, lout), jnp.float32),
        grid_spec=pltpu.PrefetchScalarGridSpec(
            num_scalar_prefetch=0,
            grid=(n,),
            in_specs=[
                pl.BlockSpec((pl.Squeezed(), cin, l_in), lambda i: (i, 0, 0)),  # slab
                pl.BlockSpec((9, cout, cin), lambda i: (0, 0, 0)),              # taps
                pl.BlockSpec((cout, 4), lambda i: (0, 0)),                      # params
                pl.BlockSpec((1, lout), lambda i: (0, 0)),                      # mask
            ],
            out_specs=pl.BlockSpec((pl.Squeezed(), cout, lout), lambda i: (i, 0, 0)),
        ),
        compiler_params=pltpu.CompilerParams(
            dimension_semantics=("parallel",),
            vmem_limit_bytes=32 * 1024 * 1024,
        ),
    )(x_slab, w9, params, mask)

    # (N, Cout, Ho*Wp) -> (N, Cout, Ho, Wp) -> crop the 2 reflection-junk columns.
    return out.reshape(n, cout, ho, wp)[:, :, :, :wo]


# ---------------------------------------------------------------------------
# Pure-JAX/XLA reference (gather-based upsample) for correctness checking.
# ---------------------------------------------------------------------------
def upsample_bilinear_x2_align_corners_nchw(x):
    n, c, h, w = x.shape
    ho, wo = 2 * h, 2 * w
    ys = jnp.arange(ho, dtype=jnp.float32) * (h - 1) / (ho - 1)
    xs = jnp.arange(wo, dtype=jnp.float32) * (w - 1) / (wo - 1)
    y0 = jnp.floor(ys).astype(jnp.int32)
    x0 = jnp.floor(xs).astype(jnp.int32)
    y1 = jnp.minimum(y0 + 1, h - 1)
    x1 = jnp.minimum(x0 + 1, w - 1)
    wy = (ys - y0.astype(jnp.float32))[None, None, :, None]
    wx = (xs - x0.astype(jnp.float32))[None, None, None, :]

    def gather(yi, xi):
        return x[:, :, yi, :][:, :, :, xi]

    top = gather(y0, x0) * (1.0 - wx) + gather(y0, x1) * wx
    bot = gather(y1, x0) * (1.0 - wx) + gather(y1, x1) * wx
    return top * (1.0 - wy) + bot * wy


def upconv_block_ref(x_nchw, w_oihw, bias, gamma, beta):
    x = x_nchw.astype(jnp.float32)
    x_up = upsample_bilinear_x2_align_corners_nchw(x)
    xp = jnp.pad(x_up, ((0, 0), (0, 0), (1, 1), (1, 1)), mode="reflect")
    out = jax.lax.conv_general_dilated(
        xp, w_oihw.astype(jnp.float32), window_strides=(1, 1), padding="VALID",
        dimension_numbers=("NCHW", "OIHW", "NCHW"),
    ) + bias[None, :, None, None]
    mean = out.mean(axis=(2, 3), keepdims=True)
    var = ((out - mean) ** 2).mean(axis=(2, 3), keepdims=True)
    y = (out - mean) / jnp.sqrt(var + EPS)
    y = y * gamma[None, :, None, None] + beta[None, :, None, None]
    return jnp.maximum(y, 0.0)


if __name__ == "__main__":
    key = jax.random.PRNGKey(0)
    k_x, k_w, k_b, k_g, k_be = jax.random.split(key, 5)

    N, C_IN, C_OUT, H, W = 2, 4, 8, 16, 16

    x = jax.random.normal(k_x, (N, C_IN, H, W), jnp.float32)
    # nn.Conv2d(in_ch, out_ch, 3) weight: (out_ch, in_ch, 3, 3); deterministic init.
    w = jax.random.normal(k_w, (C_OUT, C_IN, 3, 3), jnp.float32) * 0.1
    b = jax.random.normal(k_b, (C_OUT,), jnp.float32) * 0.1
    # InstanceNorm2d(affine=True) params (non-trivial deterministic values).
    gamma = 1.0 + 0.1 * jax.random.normal(k_g, (C_OUT,), jnp.float32)
    beta = 0.1 * jax.random.normal(k_be, (C_OUT,), jnp.float32)

    out = jax.block_until_ready(upconv_block(x, w, b, gamma, beta))
    ref = jax.block_until_ready(upconv_block_ref(x, w, b, gamma, beta))

    assert out.shape == (N, C_OUT, 2 * H, 2 * W), out.shape
    # bf16-streamed MXU inputs -> compare against the f32 reference with looser tol.
    assert jnp.allclose(out, ref, rtol=5e-2, atol=5e-2), float(
        jnp.max(jnp.abs(out - ref))
    )
    print("KERNEL_OK")
</pallas_src>

<mosaic_0001>
module attributes {stable_mosaic.version = 11 : i64} {
  func.func @_upconv_kernel(%arg0: i32, %arg1: memref<1x4x1280xbf16, #tpu.memory_space<vmem>>, %arg2: memref<9x8x4xbf16, #tpu.memory_space<vmem>>, %arg3: memref<8x4xf32, #tpu.memory_space<vmem>>, %arg4: memref<1x1088xf32, #tpu.memory_space<vmem>>, %arg5: memref<1x8x1088xf32, #tpu.memory_space<vmem>>) attributes {dimension_semantics = [#tpu.dimension_semantics<parallel>], iteration_bounds = array<i64: 2>, scalar_prefetch = 0 : i64, scratch_operands = 0 : i64, tpu.core_type = #tpu.core_type<tc>, window_params = [{transform_indices = @transform_0, window_bounds = array<i64: 1, 4, 1280>}, {pipeline_mode = #tpu.pipeline_mode<synchronous>, transform_indices = @transform_1, window_bounds = array<i64: 9, 8, 4>}, {pipeline_mode = #tpu.pipeline_mode<synchronous>, transform_indices = @transform_2, window_bounds = array<i64: 8, 4>}, {pipeline_mode = #tpu.pipeline_mode<synchronous>, transform_indices = @transform_3, window_bounds = array<i64: 1, 1088>}, {transform_indices = @transform_4, window_bounds = array<i64: 1, 8, 1088>}]} {
    %c0 = arith.constant 0 : index
    %c0_0 = arith.constant 0 : index
    %c0_1 = arith.constant 0 : index
    %0 = vector.load %arg1[%c0, %c0_0, %c0_1] : memref<1x4x1280xbf16, #tpu.memory_space<vmem>>, vector<1x4x1280xbf16>
    %1 = vector.shape_cast %0 : vector<1x4x1280xbf16> to vector<4x1280xbf16>
    %cst = arith.constant 0.000000e+00 : f32
    %2 = vector.broadcast %cst : f32 to vector<8x1088xf32>
    %3 = vector.extract_strided_slice %1 {offsets = [0, 0], sizes = [4, 1088], strides = [1, 1]} : vector<4x1280xbf16> to vector<4x1088xbf16>
    %c0_2 = arith.constant 0 : index
    %c0_3 = arith.constant 0 : index
    %c0_4 = arith.constant 0 : index
    %4 = vector.load %arg2[%c0_2, %c0_3, %c0_4] : memref<9x8x4xbf16, #tpu.memory_space<vmem>>, vector<1x8x4xbf16>
    %5 = vector.shape_cast %4 : vector<1x8x4xbf16> to vector<8x4xbf16>
    %cst_5 = arith.constant dense<0.000000e+00> : vector<8x1088xf32>
    %6 = tpu.matmul %5, %3, %cst_5 {dimension_numbers = #tpu.dot_dimension_numbers<[1], [0], [0], [1], [0, 0, 1, 1], [], []>} : vector<8x4xbf16>, vector<4x1088xbf16>, vector<8x1088xf32> -> vector<8x1088xf32>
    %7 = arith.addf %2, %6 : vector<8x1088xf32>
    %8 = vector.extract_strided_slice %1 {offsets = [0, 1], sizes = [4, 1088], strides = [1, 1]} : vector<4x1280xbf16> to vector<4x1088xbf16>
    %c1 = arith.constant 1 : index
    %c0_6 = arith.constant 0 : index
    %c0_7 = arith.constant 0 : index
    %9 = vector.load %arg2[%c1, %c0_6, %c0_7] : memref<9x8x4xbf16, #tpu.memory_space<vmem>>, vector<1x8x4xbf16>
    %10 = vector.shape_cast %9 : vector<1x8x4xbf16> to vector<8x4xbf16>
    %cst_8 = arith.constant dense<0.000000e+00> : vector<8x1088xf32>
    %11 = tpu.matmul %10, %8, %cst_8 {dimension_numbers = #tpu.dot_dimension_numbers<[1], [0], [0], [1], [0, 0, 1, 1], [], []>} : vector<8x4xbf16>, vector<4x1088xbf16>, vector<8x1088xf32> -> vector<8x1088xf32>
    %12 = arith.addf %7, %11 : vector<8x1088xf32>
    %13 = vector.extract_strided_slice %1 {offsets = [0, 2], sizes = [4, 1088], strides = [1, 1]} : vector<4x1280xbf16> to vector<4x1088xbf16>
    %c2 = arith.constant 2 : index
    %c0_9 = arith.constant 0 : index
    %c0_10 = arith.constant 0 : index
    %14 = vector.load %arg2[%c2, %c0_9, %c0_10] : memref<9x8x4xbf16, #tpu.memory_space<vmem>>, vector<1x8x4xbf16>
    %15 = vector.shape_cast %14 : vector<1x8x4xbf16> to vector<8x4xbf16>
    %cst_11 = arith.constant dense<0.000000e+00> : vector<8x1088xf32>
    %16 = tpu.matmul %15, %13, %cst_11 {dimension_numbers = #tpu.dot_dimension_numbers<[1], [0], [0], [1], [0, 0, 1, 1], [], []>} : vector<8x4xbf16>, vector<4x1088xbf16>, vector<8x1088xf32> -> vector<8x1088xf32>
    %17 = arith.addf %12, %16 : vector<8x1088xf32>
    %18 = vector.extract_strided_slice %1 {offsets = [0, 34], sizes = [4, 1088], strides = [1, 1]} : vector<4x1280xbf16> to vector<4x1088xbf16>
    %c3 = arith.constant 3 : index
    %c0_12 = arith.constant 0 : index
    %c0_13 = arith.constant 0 : index
    %19 = vector.load %arg2[%c3, %c0_12, %c0_13] : memref<9x8x4xbf16, #tpu.memory_space<vmem>>, vector<1x8x4xbf16>
    %20 = vector.shape_cast %19 : vector<1x8x4xbf16> to vector<8x4xbf16>
    %cst_14 = arith.constant dense<0.000000e+00> : vector<8x1088xf32>
    %21 = tpu.matmul %20, %18, %cst_14 {dimension_numbers = #tpu.dot_dimension_numbers<[1], [0], [0], [1], [0, 0, 1, 1], [], []>} : vector<8x4xbf16>, vector<4x1088xbf16>, vector<8x1088xf32> -> vector<8x1088xf32>
    %22 = arith.addf %17, %21 : vector<8x1088xf32>
    %23 = vector.extract_strided_slice %1 {offsets = [0, 35], sizes = [4, 1088], strides = [1, 1]} : vector<4x1280xbf16> to vector<4x1088xbf16>
    %c4 = arith.constant 4 : index
    %c0_15 = arith.constant 0 : index
    %c0_16 = arith.constant 0 : index
    %24 = vector.load %arg2[%c4, %c0_15, %c0_16] : memref<9x8x4xbf16, #tpu.memory_space<vmem>>, vector<1x8x4xbf16>
    %25 = vector.shape_cast %24 : vector<1x8x4xbf16> to vector<8x4xbf16>
    %cst_17 = arith.constant dense<0.000000e+00> : vector<8x1088xf32>
    %26 = tpu.matmul %25, %23, %cst_17 {dimension_numbers = #tpu.dot_dimension_numbers<[1], [0], [0], [1], [0, 0, 1, 1], [], []>} : vector<8x4xbf16>, vector<4x1088xbf16>, vector<8x1088xf32> -> vector<8x1088xf32>
    %27 = arith.addf %22, %26 : vector<8x1088xf32>
    %28 = vector.extract_strided_slice %1 {offsets = [0, 36], sizes = [4, 1088], strides = [1, 1]} : vector<4x1280xbf16> to vector<4x1088xbf16>
    %c5 = arith.constant 5 : index
    %c0_18 = arith.constant 0 : index
    %c0_19 = arith.constant 0 : index
    %29 = vector.load %arg2[%c5, %c0_18, %c0_19] : memref<9x8x4xbf16, #tpu.memory_space<vmem>>, vector<1x8x4xbf16>
    %30 = vector.shape_cast %29 : vector<1x8x4xbf16> to vector<8x4xbf16>
    %cst_20 = arith.constant dense<0.000000e+00> : vector<8x1088xf32>
    %31 = tpu.matmul %30, %28, %cst_20 {dimension_numbers = #tpu.dot_dimension_numbers<[1], [0], [0], [1], [0, 0, 1, 1], [], []>} : vector<8x4xbf16>, vector<4x1088xbf16>, vector<8x1088xf32> -> vector<8x1088xf32>
    %32 = arith.addf %27, %31 : vector<8x1088xf32>
    %33 = vector.extract_strided_slice %1 {offsets = [0, 68], sizes = [4, 1088], strides = [1, 1]} : vector<4x1280xbf16> to vector<4x1088xbf16>
    %c6 = arith.constant 6 : index
    %c0_21 = arith.constant 0 : index
    %c0_22 = arith.constant 0 : index
    %34 = vector.load %arg2[%c6, %c0_21, %c0_22] : memref<9x8x4xbf16, #tpu.memory_space<vmem>>, vector<1x8x4xbf16>
    %35 = vector.shape_cast %34 : vector<1x8x4xbf16> to vector<8x4xbf16>
    %cst_23 = arith.constant dense<0.000000e+00> : vector<8x1088xf32>
    %36 = tpu.matmul %35, %33, %cst_23 {dimension_numbers = #tpu.dot_dimension_numbers<[1], [0], [0], [1], [0, 0, 1, 1], [], []>} : vector<8x4xbf16>, vector<4x1088xbf16>, vector<8x1088xf32> -> vector<8x1088xf32>
    %37 = arith.addf %32, %36 : vector<8x1088xf32>
    %38 = vector.extract_strided_slice %1 {offsets = [0, 69], sizes = [4, 1088], strides = [1, 1]} : vector<4x1280xbf16> to vector<4x1088xbf16>
    %c7 = arith.constant 7 : index
    %c0_24 = arith.constant 0 : index
    %c0_25 = arith.constant 0 : index
    %39 = vector.load %arg2[%c7, %c0_24, %c0_25] : memref<9x8x4xbf16, #tpu.memory_space<vmem>>, vector<1x8x4xbf16>
    %40 = vector.shape_cast %39 : vector<1x8x4xbf16> to vector<8x4xbf16>
    %cst_26 = arith.constant dense<0.000000e+00> : vector<8x1088xf32>
    %41 = tpu.matmul %40, %38, %cst_26 {dimension_numbers = #tpu.dot_dimension_numbers<[1], [0], [0], [1], [0, 0, 1, 1], [], []>} : vector<8x4xbf16>, vector<4x1088xbf16>, vector<8x1088xf32> -> vector<8x1088xf32>
    %42 = arith.addf %37, %41 : vector<8x1088xf32>
    %43 = vector.extract_strided_slice %1 {offsets = [0, 70], sizes = [4, 1088], strides = [1, 1]} : vector<4x1280xbf16> to vector<4x1088xbf16>
    %c8 = arith.constant 8 : index
    %c0_27 = arith.constant 0 : index
    %c0_28 = arith.constant 0 : index
    %44 = vector.load %arg2[%c8, %c0_27, %c0_28] : memref<9x8x4xbf16, #tpu.memory_space<vmem>>, vector<1x8x4xbf16>
    %45 = vector.shape_cast %44 : vector<1x8x4xbf16> to vector<8x4xbf16>
    %cst_29 = arith.constant dense<0.000000e+00> : vector<8x1088xf32>
    %46 = tpu.matmul %45, %43, %cst_29 {dimension_numbers = #tpu.dot_dimension_numbers<[1], [0], [0], [1], [0, 0, 1, 1], [], []>} : vector<8x4xbf16>, vector<4x1088xbf16>, vector<8x1088xf32> -> vector<8x1088xf32>
    %47 = arith.addf %42, %46 : vector<8x1088xf32>
    %c0_30 = arith.constant 0 : index
    %c0_31 = arith.constant 0 : index
    %48 = vector.load %arg3[%c0_30, %c0_31] : memref<8x4xf32, #tpu.memory_space<vmem>>, vector<8x4xf32>
    %49 = vector.extract_strided_slice %48 {offsets = [0, 0], sizes = [8, 1], strides = [1, 1]} : vector<8x4xf32> to vector<8x1xf32>
    %50 = vector.extract_strided_slice %48 {offsets = [0, 1], sizes = [8, 1], strides = [1, 1]} : vector<8x4xf32> to vector<8x1xf32>
    %51 = vector.extract_strided_slice %48 {offsets = [0, 2], sizes = [8, 1], strides = [1, 1]} : vector<8x4xf32> to vector<8x1xf32>
    %52 = vector.broadcast %49 : vector<8x1xf32> to vector<8x1088xf32>
    %53 = arith.addf %47, %52 : vector<8x1088xf32>
    %c0_32 = arith.constant 0 : index
    %c0_33 = arith.constant 0 : index
    %54 = vector.load %arg4[%c0_32, %c0_33] : memref<1x1088xf32, #tpu.memory_space<vmem>>, vector<1x1088xf32>
    %55 = vector.broadcast %54 : vector<1x1088xf32> to vector<8x1088xf32>
    %56 = arith.mulf %53, %55 : vector<8x1088xf32>
    %cst_34 = arith.constant dense<0.000000e+00> : vector<8xf32>
    %57 = vector.multi_reduction <add>, %56, %cst_34 [1] : vector<8x1088xf32> to vector<8xf32>
    %58 = vector.shape_cast %57 : vector<8xf32> to vector<8x1xf32>
    %cst_35 = arith.constant 9.765625E-4 : f32
    %59 = vector.broadcast %cst_35 : f32 to vector<8x1xf32>
    %60 = arith.mulf %58, %59 : vector<8x1xf32>
    %61 = vector.broadcast %60 : vector<8x1xf32> to vector<8x1088xf32>
    %62 = arith.subf %53, %61 : vector<8x1088xf32>
    %63 = vector.broadcast %54 : vector<1x1088xf32> to vector<8x1088xf32>
    %64 = arith.mulf %62, %63 : vector<8x1088xf32>
    %65 = arith.mulf %64, %64 : vector<8x1088xf32>
    %cst_36 = arith.constant dense<0.000000e+00> : vector<8xf32>
    %66 = vector.multi_reduction <add>, %65, %cst_36 [1] : vector<8x1088xf32> to vector<8xf32>
    %67 = vector.shape_cast %66 : vector<8xf32> to vector<8x1xf32>
    %cst_37 = arith.constant 9.765625E-4 : f32
    %68 = vector.broadcast %cst_37 : f32 to vector<8x1xf32>
    %69 = arith.mulf %67, %68 : vector<8x1xf32>
    %cst_38 = arith.constant 9.99999974E-6 : f32
    %70 = vector.broadcast %cst_38 : f32 to vector<8x1xf32>
    %71 = arith.addf %69, %70 : vector<8x1xf32>
    %72 = math.rsqrt %71 : vector<8x1xf32>
    %73 = arith.mulf %72, %50 : vector<8x1xf32>
    %74 = vector.broadcast %60 : vector<8x1xf32> to vector<8x1088xf32>
    %75 = arith.subf %53, %74 : vector<8x1088xf32>
    %76 = vector.broadcast %73 : vector<8x1xf32> to vector<8x1088xf32>
    %77 = arith.mulf %75, %76 : vector<8x1088xf32>
    %78 = vector.broadcast %51 : vector<8x1xf32> to vector<8x1088xf32>
    %79 = arith.addf %77, %78 : vector<8x1088xf32>
    %cst_39 = arith.constant 0.000000e+00 : f32
    %80 = vector.broadcast %cst_39 : f32 to vector<8x1088xf32>
    %81 = arith.maximumf %79, %80 : vector<8x1088xf32>
    %c0_40 = arith.constant 0 : index
    %c0_41 = arith.constant 0 : index
    %c0_42 = arith.constant 0 : index
    %82 = vector.load %arg5[%c0_40, %c0_41, %c0_42] : memref<1x8x1088xf32, #tpu.memory_space<vmem>>, vector<1x8x1088xf32>
    %83 = vector.shape_cast %82 : vector<1x8x1088xf32> to vector<8x1088xf32>
    %84 = vector.shape_cast %81 : vector<8x1088xf32> to vector<1x8x1088xf32>
    tpu.vector_store %arg5[%c0_40, %c0_41, %c0_42], %84 {strides = array<i32>} : memref<1x8x1088xf32, #tpu.memory_space<vmem>>, vector<1x8x1088xf32>,
    return
  }
  func.func @transform_0(%arg0: i32) -> (i32, i32, i32) {
    %c0_i32 = arith.constant 0 : i32
    %c0_i32_0 = arith.constant 0 : i32
    %c0_i32_1 = arith.constant 0 : i32
    return %arg0, %c0_i32, %c0_i32_0 : i32, i32, i32
  }
  func.func @transform_1(%arg0: i32) -> (i32, i32, i32) {
    %c0_i32 = arith.constant 0 : i32
    %c0_i32_0 = arith.constant 0 : i32
    %c0_i32_1 = arith.constant 0 : i32
    %c0_i32_2 = arith.constant 0 : i32
    return %c0_i32, %c0_i32_0, %c0_i32_1 : i32, i32, i32
  }
  func.func @transform_2(%arg0: i32) -> (i32, i32) {
    %c0_i32 = arith.constant 0 : i32
    %c0_i32_0 = arith.constant 0 : i32
    %c0_i32_1 = arith.constant 0 : i32
    return %c0_i32, %c0_i32_0 : i32, i32
  }
  func.func @transform_3(%arg0: i32) -> (i32, i32) {
    %c0_i32 = arith.constant 0 : i32
    %c0_i32_0 = arith.constant 0 : i32
    %c0_i32_1 = arith.constant 0 : i32
    return %c0_i32, %c0_i32_0 : i32, i32
  }
  func.func @transform_4(%arg0: i32) -> (i32, i32, i32) {
    %c0_i32 = arith.constant 0 : i32
    %c0_i32_0 = arith.constant 0 : i32
    %c0_i32_1 = arith.constant 0 : i32
    return %arg0, %c0_i32, %c0_i32_0 : i32, i32, i32
  }
}

</mosaic_0001>

<llo_original>
// kernel: tpu_custom_call.1
$region0: #{tpu_custom_call.1}
  #allocation0 [shape = 'u32[]', space=smem, size = 0x4, offset = 0x4, fixed_abs, tag = 'smem constant byte address 0x4 - core index']
  #allocation1 [shape = 'u32[144,128]{1,0:T(1,128)}', space=vmem, size = 0x12000, scoped, tag = 'internal scratch']
  %s0 = inlined_call_operand.vmem [shape: bf16[2,4,1280], index: 0, kind: input, shape index: {}]
  %s1 = inlined_call_operand.vmem [shape: bf16[9,8,4], index: 1, kind: input, shape index: {}]
  %s2 = inlined_call_operand.vmem [shape: f32[8,4], index: 2, kind: input, shape index: {}]
  %s3 = inlined_call_operand.vmem [shape: f32[1,1088], index: 3, kind: input, shape index: {}]
  %s4 = inlined_call_operand.hbm [shape: f32[2,8,1088], index: 4, kind: output, shape index: {}]
  %s5 = sld [smem:[#allocation0]]
  $region49: #{tpu_custom_call.1} parent=0
    _
  %s7 = ssub.s32 1, %s5
  %s8 = scalar_select 0, %s7, %s5
  $region1: #{tpu_custom_call.1} parent=0
    #allocation2 [shape = 'u8[73728]{0}', space=vmem, size = 0x12000, scoped, tag = 'output window, operand 0']
    #allocation3 [shape = 's32[2]{0}', space=sflag, size = 0x8, scoped, tag = 'scoped memory for tpu_custom_call.1']
    %9 = vsyncpa [#allocation3], 0
    %s10 = scalar_lea.sflag [#allocation3], 1
    %11 = vsyncpa %s10, 0
    loop: start=0, step=1, limit=4
    $region2: #{tpu_custom_call.1} parent=1 // loop_pre_header
      _
    $region3: #{tpu_custom_call.1} parent=1 // loop_header
      %s13 = sphi 0, %s17
      %p14 = scmp.ge.s32.totalorder %s13, 4
      %s23 = sphi 0, %s25
      %s26 = sphi 0, %s23
      %s27 = sphi 0, %s26
      %s43 = sphi 0, %s27
      %s47 = sphi 0, %s47
      %s49 = sphi 0, %s47
      %s50 = sphi 0, %s49
      %s64 = sphi 0, %s50
      %s68 = sphi 0, %s68
      %s70 = sphi 0, %s68
      %s71 = sphi 0, %s70
      %s85 = sphi 0, %s71
      %s89 = sphi 0, %s89
      %s91 = sphi 0, %s89
      %s92 = sphi 0, %s91
      %s106 = sphi 0, %s92
      %s112 = sphi 0, %s114
      %s115 = sphi 0, %s112
      %s116 = sphi 0, %s115
      %s132 = sphi 0, %s116
    $region4: #{tpu_custom_call.1} parent=1 // loop_header_branch
      %16 = sbr.rel (%p14) target = $region8
    $region5: #{tpu_custom_call.1} parent=1 // loop_body
      %s18 = ssub.s32 %s13, 1
      %s19 = ssub.s32 %s13, 2
      %s20 = sadd.s32 %s13, 1
      %s21 = ssub.s32 %s13, %s20
      %p22 = scmp.eq.s32.totalorder %s21, 0
      %s24 = sadd.s32 %s23, 1
      %s25 = scalar_select %p22, %s23, %s24
      %p28 = pneg %p22
      %p29 = scmp.eq.s32.totalorder %s13, 1
      %p30 = por %p28, %p29
      %p31 = scmp.ne.s32.totalorder %s23, %s26
      %p32 = scmp.eq.s32.totalorder %s13, 0
      %p33 = por %p31, %p32
      %p34 = scmp.ne.s32.totalorder %s23, %s26
      %p35 = scmp.eq.s32.totalorder %s18, 1
      %p36 = por %p34, %p35
      %p37 = scmp.ne.s32.totalorder %s26, %s27
      %p38 = scmp.eq.s32.totalorder %s18, 0
      %p39 = por %p37, %p38
      %p40 = scmp.ne.s32.totalorder %s26, %s27
      %p41 = scmp.eq.s32.totalorder %s19, 1
      %p42 = por %p40, %p41
      %p44 = scmp.ne.s32.totalorder %s27, %s43
      %p45 = scmp.eq.s32.totalorder %s19, 0
      %p46 = por %p44, %p45
      %s48 = sadd.s32 %s47, 1
      %p51 = scmp.eq.s32.totalorder %s13, 1
      %p52 = scmp.ne.s32.totalorder %s47, %s49
      %p53 = scmp.eq.s32.totalorder %s13, 0
      %p54 = por %p52, %p53
      %p55 = scmp.ne.s32.totalorder %s47, %s49
      %p56 = scmp.eq.s32.totalorder %s18, 1
      %p57 = por %p55, %p56
      %p58 = scmp.ne.s32.totalorder %s49, %s50
      %p59 = scmp.eq.s32.totalorder %s18, 0
      %p60 = por %p58, %p59
      %p61 = scmp.ne.s32.totalorder %s49, %s50
      %p62 = scmp.eq.s32.totalorder %s19, 1
      %p63 = por %p61, %p62
      %p65 = scmp.ne.s32.totalorder %s50, %s64
      %p66 = scmp.eq.s32.totalorder %s19, 0
      %p67 = por %p65, %p66
      %s69 = sadd.s32 %s68, 1
      %p72 = scmp.eq.s32.totalorder %s13, 1
      %p73 = scmp.ne.s32.totalorder %s68, %s70
      %p74 = scmp.eq.s32.totalorder %s13, 0
      %p75 = por %p73, %p74
      %p76 = scmp.ne.s32.totalorder %s68, %s70
      %p77 = scmp.eq.s32.totalorder %s18, 1
      %p78 = por %p76, %p77
      %p79 = scmp.ne.s32.totalorder %s70, %s71
      %p80 = scmp.eq.s32.totalorder %s18, 0
      %p81 = por %p79, %p80
      %p82 = scmp.ne.s32.totalorder %s70, %s71
      %p83 = scmp.eq.s32.totalorder %s19, 1
      %p84 = por %p82, %p83
      %p86 = scmp.ne.s32.totalorder %s71, %s85
      %p87 = scmp.eq.s32.totalorder %s19, 0
      %p88 = por %p86, %p87
      %s90 = sadd.s32 %s89, 1
      %p93 = scmp.eq.s32.totalorder %s13, 1
      %p94 = scmp.ne.s32.totalorder %s89, %s91
      %p95 = scmp.eq.s32.totalorder %s13, 0
      %p96 = por %p94, %p95
      %p97 = scmp.ne.s32.totalorder %s89, %s91
      %p98 = scmp.eq.s32.totalorder %s18, 1
      %p99 = por %p97, %p98
      %p100 = scmp.ne.s32.totalorder %s91, %s92
      %p101 = scmp.eq.s32.totalorder %s18, 0
      %p102 = por %p100, %p101
      %p103 = scmp.ne.s32.totalorder %s91, %s92
      %p104 = scmp.eq.s32.totalorder %s19, 1
      %p105 = por %p103, %p104
      %p107 = scmp.ne.s32.totalorder %s92, %s106
      %p108 = scmp.eq.s32.totalorder %s19, 0
      %p109 = por %p107, %p108
      %s110 = ssub.s32 %s13, %s20
      %p111 = scmp.eq.s32.totalorder %s110, 0
      %s113 = sadd.s32 %s112, 1
      %s114 = scalar_select %p111, %s112, %s113
      %p117 = pneg %p111
      %p118 = scmp.eq.s32.totalorder %s13, 1
      %p119 = por %p117, %p118
      %p120 = scmp.ne.s32.totalorder %s112, %s115
      %p121 = scmp.eq.s32.totalorder %s13, 0
      %p122 = por %p120, %p121
      %p123 = scmp.ne.s32.totalorder %s112, %s115
      %p124 = scmp.eq.s32.totalorder %s18, 1
      %p125 = por %p123, %p124
      %p126 = scmp.ne.s32.totalorder %s115, %s116
      %p127 = scmp.eq.s32.totalorder %s18, 0
      %p128 = por %p126, %p127
      %p129 = scmp.ne.s32.totalorder %s115, %s116
      %p130 = scmp.eq.s32.totalorder %s19, 1
      %p131 = por %p129, %p130
      %p133 = scmp.ne.s32.totalorder %s116, %s132
      %p134 = scmp.eq.s32.totalorder %s19, 0
      %p135 = por %p133, %p134
      %p136 = scmp.le.s32.totalorder 1, %s13
      %p137 = scmp.lt.s32.totalorder %s13, 3
      %p138 = pnand %p136, %p137
      %p139 = pneg %p138
      // Predicated region
      $region9: #{tpu_custom_call.1} parent=5 // pred_check
        _
      $region10: #{tpu_custom_call.1} parent=5 // pred_check_branch
        %141 = sbr.rel (%p138) target = $region12
      $region11: #{tpu_custom_call.1} parent=5 // pred_region
        %s142 = ssub.s32 %s13, 1
        // Predicated region
        $region13: #{tpu_custom_call.1} parent=11 // pred_check
          %p143 = pneg %p60
        $region14: #{tpu_custom_call.1} parent=11 // pred_check_branch
          %145 = sbr.rel (%p143) target = $region16
        $region15: #{tpu_custom_call.1} parent=11 // pred_region
          _
        $region16: #{tpu_custom_call.1} parent=11 // pred_fallthru
          _
        // Predicated region
        $region17: #{tpu_custom_call.1} parent=11 // pred_check
          %p146 = pneg %p81
        $region18: #{tpu_custom_call.1} parent=11 // pred_check_branch
          %148 = sbr.rel (%p146) target = $region20
        $region19: #{tpu_custom_call.1} parent=11 // pred_region
          _
        $region20: #{tpu_custom_call.1} parent=11 // pred_fallthru
          _
        // Predicated region
        $region21: #{tpu_custom_call.1} parent=11 // pred_check
          %p149 = pneg %p102
        $region22: #{tpu_custom_call.1} parent=11 // pred_check_branch
          %151 = sbr.rel (%p149) target = $region24
        $region23: #{tpu_custom_call.1} parent=11 // pred_region
          _
        $region24: #{tpu_custom_call.1} parent=11 // pred_fallthru
          _
      $region12: #{tpu_custom_call.1} parent=5 // pred_fallthru
        _
      %p152 = scmp.lt.s32.totalorder %s13, 2
      // Predicated region
      $region25: #{tpu_custom_call.1} parent=5 // pred_check
        %p153 = pneg %p152
      $region26: #{tpu_custom_call.1} parent=5 // pred_check_branch
        %155 = sbr.rel (%p153) target = $region28
      $region27: #{tpu_custom_call.1} parent=5 // pred_region
        // Predicated region
        $region29: #{tpu_custom_call.1} parent=27 // pred_check
          %p156 = pneg %p33
        $region30: #{tpu_custom_call.1} parent=27 // pred_check_branch
          %158 = sbr.rel (%p156) target = $region32
        $region31: #{tpu_custom_call.1} parent=27 // pred_region
          %p159 = scmp.lt.s32.totalorder %s13, 1
          %s160 = scalar_select %p159, %s13, 1
          %s161 = smul.addr %s160, 10
          %s162 = smul.addr %s161, 2
          %s163 = scalar_lea.vmem %s0, %s162
        $region32: #{tpu_custom_call.1} parent=27 // pred_fallthru
          _
      $region28: #{tpu_custom_call.1} parent=5 // pred_fallthru
        _
      %p164 = scmp.le.s32.totalorder 1, %s13
      %p165 = scmp.lt.s32.totalorder %s13, 3
      %p166 = pnand %p164, %p165
      %p167 = pneg %p166
      // Predicated region
      $region33: #{tpu_custom_call.1} parent=5 // pred_check
        _
      $region34: #{tpu_custom_call.1} parent=5 // pred_check_branch
        %169 = sbr.rel (%p166) target = $region36
      $region35: #{tpu_custom_call.1} parent=5 // pred_region
        %s170 = ssub.s32 %s13, 1
        %p171 = scmp.lt.s32.totalorder %s18, 1
        %s172 = scalar_select %p171, %s18, 1
        %s173 = smul.addr %s172, 10
        %s174 = smul.addr %s173, 2
        %s175 = scalar_lea.vmem %s0, %s174
        %p176 = pneg %p39
        %p177 = pneg %p36
        %p178 = pneg %p60
        %p179 = pneg %p57
        %p180 = pneg %p81
        %p181 = pneg %p78
        %p182 = pneg %p102
        %p183 = pneg %p99
        %p184 = pneg %p128
        %p185 = pneg %p125
        %s186 = sand.u32 %s115, 1
        %s187 = scalar_lea.sflag [#allocation3], %s186
        %s188 = sand.u32 %s115, 1
        %s189 = smul.addr %s188, 72
        %s190 = scalar_lea.vmem [#allocation2], %s189
        %p191 = scmp.lt.s32.totalorder %s18, 1
        %s192 = scalar_select %p191, %s18, 1
        %s193 = smul.addr %s192, 10
        %s194 = smul.addr %s193, 2
        %s195 = scalar_lea.vmem %s0, %s194
        %v197 = vld [vmem:[%s195] sm:$0xff]
        %v198 = vld [vmem:[%s195 + $0x8] sm:$0xff]
        %v199 = vld [vmem:[%s195 + $0x10] sm:$0xf]
        %v200 = vld [vmem:[%s1] sm:$0xf]
        %s201 = scalar_lea.vmem %s1, 4
        %v202 = vld [vmem:[%s201] sm:$0xf]
        %v206 = vcombine.high %v197, %v197
        %v208 = vunpack.c.l.s4 1983009808
        %v209 = vunpack.c.0.s8 %v208
        %v210 = vlaneseq
        %v211 = vshrl.u32 %v210, 7
        %v212 = vsub.s32 %v209, %v211
        %v213 = vrot.slane %v197, %v212
        %v215 = vunpack.c.l.s4 1983009808
        %v216 = vunpack.c.0.s8 %v215
        %v217 = vlaneseq
        %v218 = vshrl.u32 %v217, 7
        %v219 = vsub.s32 %v216, %v218
        %v220 = vrot.slane %v206, %v219
        %v221 = vcombine.high %v213, %v213
        %v222 = vcombine.high %v220, %v220
        %v223 = vcombine.high %v198, %v198
        %v225 = vunpack.c.l.s4 1983009808
        %v226 = vunpack.c.0.s8 %v225
        %v227 = vlaneseq
        %v228 = vshrl.u32 %v227, 7
        %v229 = vsub.s32 %v226, %v228
        %v230 = vrot.slane %v198, %v229
        %v232 = vunpack.c.l.s4 1983009808
        %v233 = vunpack.c.0.s8 %v232
        %v234 = vlaneseq
        %v235 = vshrl.u32 %v234, 7
        %v236 = vsub.s32 %v233, %v235
        %v237 = vrot.slane %v223, %v236
        %v238 = vcombine.high %v230, %v230
        %v239 = vcombine.high %v237, %v237
        %v241 = vunpack.c.l.s4 1983009808
        %v242 = vunpack.c.0.s8 %v241
        %v243 = vlaneseq
        %v244 = vshrl.u32 %v243, 7
        %v245 = vsub.s32 %v242, %v244
        %v246 = vrot.slane %v199, %v245
        %247 = vrot.lane.b32.xlu0 %v213, 127
        %v248 = vpop.permute.xlu0 %247
        %249 = vrot.lane.b32.xlu0 %v221, 127
        %v250 = vpop.permute.xlu0 %249
        %251 = vrot.lane.b32.xlu0 %v220, 127
        %v252 = vpop.permute.xlu0 %251
        %253 = vrot.lane.b32.xlu0 %v222, 127
        %v254 = vpop.permute.xlu0 %253
        %255 = vrot.lane.b32.xlu0 %v230, 127
        %v256 = vpop.permute.xlu0 %255
        %257 = vrot.lane.b32.xlu0 %v238, 127
        %v258 = vpop.permute.xlu0 %257
        %259 = vrot.lane.b32.xlu0 %v237, 127
        %v260 = vpop.permute.xlu0 %259
        %261 = vrot.lane.b32.xlu0 %v239, 127
        %v262 = vpop.permute.xlu0 %261
        %263 = vrot.lane.b32.xlu0 %v246, 127
        %v264 = vpop.permute.xlu0 %263
        %vm265 = vcmask 1039360
        %v266 = vsel %vm265, %v248, %v250
        %v267 = vsel %vm265, %v250, %v252
        %v268 = vsel %vm265, %v252, %v254
        %v269 = vsel %vm265, %v254, %v256
        %v270 = vsel %vm265, %v256, %v258
        %v271 = vsel %vm265, %v258, %v260
        %v272 = vsel %vm265, %v260, %v262
        %v273 = vsel %vm265, %v262, %v264
        %vm274 = vcmask 31744
        %v276 = vsel %vm274, %v202, 0
        %vm278 = vcmask 1041408
        %v280 = vsel %vm278, %v266, 0
        %v283 = vsel %vm278, %v267, 0
        %v286 = vsel %vm278, %v268, 0
        %v289 = vsel %vm278, %v269, 0
        %v292 = vsel %vm278, %v270, 0
        %v295 = vsel %vm278, %v271, 0
        %v298 = vsel %vm278, %v272, 0
        %v301 = vsel %vm278, %v273, 0
        %v304 = vsel %vm278, %v264, 0
        %306 = vmatprep.subr.bf16.mxu0 0
        %307 = vmatpush1.bf16.msra.mxu0 0
        %308 = vmatprep.subr.bf16.mxu0 0
        %309 = vmatpush1.bf16.msra.mxu0 0
        %310 = vmatprep.subr.bf16.mxu0 0
        %311 = vmatpush1.bf16.msra.mxu0 0
        %312 = vmatprep.subr.bf16.mxu0 0
        %313 = vmatpush1.bf16.msra.mxu0 0
        %314 = vmatprep.subr.bf16.mxu0 0
        %315 = vmatpush1.bf16.msra.mxu0 0
        %316 = vmatprep.subr.bf16.mxu0 0
        %317 = vmatpush1.bf16.msra.mxu0 0
        %318 = vmatprep.subr.bf16.mxu0 0
        %319 = vmatpush1.bf16.msra.mxu0 0
        %320 = vmatprep.subr.bf16.mxu0 %v283
        %321 = vmatpush1.bf16.msra.mxu0 %v280
        %322 = vmatprep.subr.bf16.mxu0 0
        %323 = vmatpush2.bf16.msra.mxu0 0
        %324 = vmatprep.subr.bf16.mxu0 0
        %325 = vmatpush2.bf16.msra.mxu0 0
        %326 = vmatprep.subr.bf16.mxu0 0
        %327 = vmatpush2.bf16.msra.mxu0 0
        %328 = vmatprep.subr.bf16.mxu0 0
        %329 = vmatpush2.bf16.msra.mxu0 0
        %330 = vmatprep.subr.bf16.mxu0 0
        %331 = vmatpush2.bf16.msra.mxu0 0
        %332 = vmatprep.subr.bf16.mxu0 0
        %333 = vmatpush2.bf16.msra.mxu0 0
        %334 = vmatprep.subr.bf16.mxu0 0
        %335 = vmatpush2.bf16.msra.mxu0 0
        %336 = vmatprep.subr.bf16.mxu0 0
        %337 = vmatpush2.bf16.msra.mxu0 0
        %338 = vmatprep.mubr.bf16.mxu0 0
        %339 = vmatmul.mubr.bf16.gmra.mxu0 %v276
        %v340 = vpop.f32.mrf.mxu0
        %v341 = vadd.f32 0.0, %v340
        %v342 = vpop.f32.mrf.mxu0
        %v343 = vadd.f32 0.0, %v342
        %v344 = vpop.f32.mrf.mxu0
        %v345 = vpop.f32.mrf.mxu0
        %346 = vdwg.mxu0
        %347 = vmatprep.subr.bf16.mxu0 0
        %348 = vmatpush1.bf16.msra.mxu0 0
        %349 = vmatprep.subr.bf16.mxu0 0
        %350 = vmatpush1.bf16.msra.mxu0 0
        %351 = vmatprep.subr.bf16.mxu0 0
        %352 = vmatpush1.bf16.msra.mxu0 0
        %353 = vmatprep.subr.bf16.mxu0 0
        %354 = vmatpush1.bf16.msra.mxu0 0
        %355 = vmatprep.subr.bf16.mxu0 0
        %356 = vmatpush1.bf16.msra.mxu0 0
        %357 = vmatprep.subr.bf16.mxu0 0
        %358 = vmatpush1.bf16.msra.mxu0 0
        %359 = vmatprep.subr.bf16.mxu0 0
        %360 = vmatpush1.bf16.msra.mxu0 0
        %361 = vmatprep.subr.bf16.mxu0 %v289
        %362 = vmatpush1.bf16.msra.mxu0 %v286
        %363 = vmatprep.subr.bf16.mxu0 0
        %364 = vmatpush2.bf16.msra.mxu0 0
        %365 = vmatprep.subr.bf16.mxu0 0
        %366 = vmatpush2.bf16.msra.mxu0 0
        %367 = vmatprep.subr.bf16.mxu0 0
        %368 = vmatpush2.bf16.msra.mxu0 0
        %369 = vmatprep.subr.bf16.mxu0 0
        %370 = vmatpush2.bf16.msra.mxu0 0
        %371 = vmatprep.subr.bf16.mxu0 0
        %372 = vmatpush2.bf16.msra.mxu0 0
        %373 = vmatprep.subr.bf16.mxu0 0
        %374 = vmatpush2.bf16.msra.mxu0 0
        %375 = vmatprep.subr.bf16.mxu0 0
        %376 = vmatpush2.bf16.msra.mxu0 0
        %377 = vmatprep.subr.bf16.mxu0 0
        %378 = vmatpush2.bf16.msra.mxu0 0
        %379 = vmatprep.mubr.bf16.mxu0 0
        %380 = vmatmul.mubr.bf16.gmra.mxu0 %v276
        %v381 = vpop.f32.mrf.mxu0
        %v382 = vadd.f32 0.0, %v381
        %v383 = vpop.f32.mrf.mxu0
        %v384 = vadd.f32 0.0, %v383
        %v385 = vpop.f32.mrf.mxu0
        %v386 = vpop.f32.mrf.mxu0
        %387 = vdwg.mxu0
        %388 = vmatprep.subr.bf16.mxu0 0
        %389 = vmatpush1.bf16.msra.mxu0 0
        %390 = vmatprep.subr.bf16.mxu0 0
        %391 = vmatpush1.bf16.msra.mxu0 0
        %392 = vmatprep.subr.bf16.mxu0 0
        %393 = vmatpush1.bf16.msra.mxu0 0
        %394 = vmatprep.subr.bf16.mxu0 0
        %395 = vmatpush1.bf16.msra.mxu0 0
        %396 = vmatprep.subr.bf16.mxu0 0
        %397 = vmatpush1.bf16.msra.mxu0 0
        %398 = vmatprep.subr.bf16.mxu0 0
        %399 = vmatpush1.bf16.msra.mxu0 0
        %400 = vmatprep.subr.bf16.mxu0 0
        %401 = vmatpush1.bf16.msra.mxu0 0
        %402 = vmatprep.subr.bf16.mxu0 %v295
        %403 = vmatpush1.bf16.msra.mxu0 %v292
        %404 = vmatprep.subr.bf16.mxu0 0
        %405 = vmatpush2.bf16.msra.mxu0 0
        %406 = vmatprep.subr.bf16.mxu0 0
        %407 = vmatpush2.bf16.msra.mxu0 0
        %408 = vmatprep.subr.bf16.mxu0 0
        %409 = vmatpush2.bf16.msra.mxu0 0
        %410 = vmatprep.subr.bf16.mxu0 0
        %411 = vmatpush2.bf16.msra.mxu0 0
        %412 = vmatprep.subr.bf16.mxu0 0
        %413 = vmatpush2.bf16.msra.mxu0 0
        %414 = vmatprep.subr.bf16.mxu0 0
        %415 = vmatpush2.bf16.msra.mxu0 0
        %416 = vmatprep.subr.bf16.mxu0 0
        %417 = vmatpush2.bf16.msra.mxu0 0
        %418 = vmatprep.subr.bf16.mxu0 0
        %419 = vmatpush2.bf16.msra.mxu0 0
        %420 = vmatprep.mubr.bf16.mxu0 0
        %421 = vmatmul.mubr.bf16.gmra.mxu0 %v276
        %v422 = vpop.f32.mrf.mxu0
        %v423 = vadd.f32 0.0, %v422
        %v424 = vpop.f32.mrf.mxu0
        %v425 = vadd.f32 0.0, %v424
        %v426 = vpop.f32.mrf.mxu0
        %v427 = vpop.f32.mrf.mxu0
        %428 = vdwg.mxu0
        %429 = vmatprep.subr.bf16.mxu0 0
        %430 = vmatpush1.bf16.msra.mxu0 0
        %431 = vmatprep.subr.bf16.mxu0 0
        %432 = vmatpush1.bf16.msra.mxu0 0
        %433 = vmatprep.subr.bf16.mxu0 0
        %434 = vmatpush1.bf16.msra.mxu0 0
        %435 = vmatprep.subr.bf16.mxu0 0
        %436 = vmatpush1.bf16.msra.mxu0 0
        %437 = vmatprep.subr.bf16.mxu0 0
        %438 = vmatpush1.bf16.msra.mxu0 0
        %439 = vmatprep.subr.bf16.mxu0 0
        %440 = vmatpush1.bf16.msra.mxu0 0
        %441 = vmatprep.subr.bf16.mxu0 0
        %442 = vmatpush1.bf16.msra.mxu0 0
        %443 = vmatprep.subr.bf16.mxu0 %v301
        %444 = vmatpush1.bf16.msra.mxu0 %v298
        %445 = vmatprep.subr.bf16.mxu0 0
        %446 = vmatpush2.bf16.msra.mxu0 0
        %447 = vmatprep.subr.bf16.mxu0 0
        %448 = vmatpush2.bf16.msra.mxu0 0
        %449 = vmatprep.subr.bf16.mxu0 0
        %450 = vmatpush2.bf16.msra.mxu0 0
        %451 = vmatprep.subr.bf16.mxu0 0
        %452 = vmatpush2.bf16.msra.mxu0 0
        %453 = vmatprep.subr.bf16.mxu0 0
        %454 = vmatpush2.bf16.msra.mxu0 0
        %455 = vmatprep.subr.bf16.mxu0 0
        %456 = vmatpush2.bf16.msra.mxu0 0
        %457 = vmatprep.subr.bf16.mxu0 0
        %458 = vmatpush2.bf16.msra.mxu0 0
        %459 = vmatprep.subr.bf16.mxu0 0
        %460 = vmatpush2.bf16.msra.mxu0 0
        %461 = vmatprep.mubr.bf16.mxu0 0
        %462 = vmatmul.mubr.bf16.gmra.mxu0 %v276
        %v463 = vpop.f32.mrf.mxu0
        %v464 = vadd.f32 0.0, %v463
        %v465 = vpop.f32.mrf.mxu0
        %v466 = vadd.f32 0.0, %v465
        %v467 = vpop.f32.mrf.mxu0
        %v468 = vpop.f32.mrf.mxu0
        %469 = vdwg.mxu0
        %470 = vmatprep.subr.bf16.mxu0 0
        %471 = vmatpush1.bf16.msra.mxu0 0
        %472 = vmatprep.subr.bf16.mxu0 0
        %473 = vmatpush1.bf16.msra.mxu0 0
        %474 = vmatprep.subr.bf16.mxu0 0
        %475 = vmatpush1.bf16.msra.mxu0 0
        %476 = vmatprep.subr.bf16.mxu0 0
        %477 = vmatpush1.bf16.msra.mxu0 0
        %478 = vmatprep.subr.bf16.mxu0 0
        %479 = vmatpush1.bf16.msra.mxu0 0
        %480 = vmatprep.subr.bf16.mxu0 0
        %481 = vmatpush1.bf16.msra.mxu0 0
        %482 = vmatprep.subr.bf16.mxu0 0
        %483 = vmatpush1.bf16.msra.mxu0 0
        %484 = vmatprep.subr.bf16.mxu0 0
        %485 = vmatpush1.bf16.msra.mxu0 %v304
        %486 = vmatprep.subr.bf16.mxu0 0
        %487 = vmatpush2.bf16.msra.mxu0 0
        %488 = vmatprep.subr.bf16.mxu0 0
        %489 = vmatpush2.bf16.msra.mxu0 0
        %490 = vmatprep.subr.bf16.mxu0 0
        %491 = vmatpush2.bf16.msra.mxu0 0
        %492 = vmatprep.subr.bf16.mxu0 0
        %493 = vmatpush2.bf16.msra.mxu0 0
        %494 = vmatprep.subr.bf16.mxu0 0
        %495 = vmatpush2.bf16.msra.mxu0 0
        %496 = vmatprep.subr.bf16.mxu0 0
        %497 = vmatpush2.bf16.msra.mxu0 0
        %498 = vmatprep.subr.bf16.mxu0 0
        %499 = vmatpush2.bf16.msra.mxu0 0
        %500 = vmatprep.subr.bf16.mxu0 0
        %501 = vmatpush2.bf16.msra.mxu0 0
        %502 = vmatprep.mubr.bf16.mxu0 0
        %503 = vmatmul.mubr.bf16.gmra.mxu0 %v276
        %v504 = vpop.f32.mrf.mxu0
        %v505 = vadd.f32 0.0, %v504
        %v506 = vpop.f32.mrf.mxu0
        %v507 = vpop.f32.mrf.mxu0
        %v508 = vpop.f32.mrf.mxu0
        %509 = vdwg.mxu0
        %v511 = vsel %vm274, %v200, 0
        %v514 = vsel %vm278, %v213, 0
        %v517 = vsel %vm278, %v221, 0
        %v520 = vsel %vm278, %v220, 0
        %v523 = vsel %vm278, %v222, 0
        %v526 = vsel %vm278, %v230, 0
        %v529 = vsel %vm278, %v238, 0
        %v532 = vsel %vm278, %v237, 0
        %v535 = vsel %vm278, %v239, 0
        %v538 = vsel %vm278, %v246, 0
        %540 = vmatprep.subr.bf16.mxu0 0
        %541 = vmatpush1.bf16.msra.mxu0 0
        %542 = vmatprep.subr.bf16.mxu0 0
        %543 = vmatpush1.bf16.msra.mxu0 0
        %544 = vmatprep.subr.bf16.mxu0 0
        %545 = vmatpush1.bf16.msra.mxu0 0
        %546 = vmatprep.subr.bf16.mxu0 0
        %547 = vmatpush1.bf16.msra.mxu0 0
        %548 = vmatprep.subr.bf16.mxu0 0
        %549 = vmatpush1.bf16.msra.mxu0 0
        %550 = vmatprep.subr.bf16.mxu0 0
        %551 = vmatpush1.bf16.msra.mxu0 0
        %552 = vmatprep.subr.bf16.mxu0 0
        %553 = vmatpush1.bf16.msra.mxu0 0
        %554 = vmatprep.subr.bf16.mxu0 %v517
        %555 = vmatpush1.bf16.msra.mxu0 %v514
        %556 = vmatprep.subr.bf16.mxu0 0
        %557 = vmatpush2.bf16.msra.mxu0 0
        %558 = vmatprep.subr.bf16.mxu0 0
        %559 = vmatpush2.bf16.msra.mxu0 0
        %560 = vmatprep.subr.bf16.mxu0 0
        %561 = vmatpush2.bf16.msra.mxu0 0
        %562 = vmatprep.subr.bf16.mxu0 0
        %563 = vmatpush2.bf16.msra.mxu0 0
        %564 = vmatprep.subr.bf16.mxu0 0
        %565 = vmatpush2.bf16.msra.mxu0 0
        %566 = vmatprep.subr.bf16.mxu0 0
        %567 = vmatpush2.bf16.msra.mxu0 0
        %568 = vmatprep.subr.bf16.mxu0 0
        %569 = vmatpush2.bf16.msra.mxu0 0
        %570 = vmatprep.subr.bf16.mxu0 0
        %571 = vmatpush2.bf16.msra.mxu0 0
        %572 = vmatprep.mubr.bf16.mxu0 0
        %573 = vmatmul.mubr.bf16.gmra.mxu0 %v511
        %v574 = vpop.f32.mrf.mxu0
        %v575 = vadd.f32 %v341, %v574
        %v576 = vpop.f32.mrf.mxu0
        %v577 = vadd.f32 %v343, %v576
        %v578 = vpop.f32.mrf.mxu0
        %v579 = vpop.f32.mrf.mxu0
        %580 = vdwg.mxu0
        %581 = vmatprep.subr.bf16.mxu0 0
        %582 = vmatpush1.bf16.msra.mxu0 0
        %583 = vmatprep.subr.bf16.mxu0 0
        %584 = vmatpush1.bf16.msra.mxu0 0
        %585 = vmatprep.subr.bf16.mxu0 0
        %586 = vmatpush1.bf16.msra.mxu0 0
        %587 = vmatprep.subr.bf16.mxu0 0
        %588 = vmatpush1.bf16.msra.mxu0 0
        %589 = vmatprep.subr.bf16.mxu0 0
        %590 = vmatpush1.bf16.msra.mxu0 0
        %591 = vmatprep.subr.bf16.mxu0 0
        %592 = vmatpush1.bf16.msra.mxu0 0
        %593 = vmatprep.subr.bf16.mxu0 0
        %594 = vmatpush1.bf16.msra.mxu0 0
        %595 = vmatprep.subr.bf16.mxu0 %v523
        %596 = vmatpush1.bf16.msra.mxu0 %v520
        %597 = vmatprep.subr.bf16.mxu0 0
        %598 = vmatpush2.bf16.msra.mxu0 0
        %599 = vmatprep.subr.bf16.mxu0 0
        %600 = vmatpush2.bf16.msra.mxu0 0
        %601 = vmatprep.subr.bf16.mxu0 0
        %602 = vmatpush2.bf16.msra.mxu0 0
        %603 = vmatprep.subr.bf16.mxu0 0
        %604 = vmatpush2.bf16.msra.mxu0 0
        %605 = vmatprep.subr.bf16.mxu0 0
        %606 = vmatpush2.bf16.msra.mxu0 0
        %607 = vmatprep.subr.bf16.mxu0 0
        %608 = vmatpush2.bf16.msra.mxu0 0
        %609 = vmatprep.subr.bf16.mxu0 0
        %610 = vmatpush2.bf16.msra.mxu0 0
        %611 = vmatprep.subr.bf16.mxu0 0
        %612 = vmatpush2.bf16.msra.mxu0 0
        %613 = vmatprep.mubr.bf16.mxu0 0
        %614 = vmatmul.mubr.bf16.gmra.mxu0 %v511
        %v615 = vpop.f32.mrf.mxu0
        %v616 = vadd.f32 %v382, %v615
        %v617 = vpop.f32.mrf.mxu0
        %v618 = vadd.f32 %v384, %v617
        %v619 = vpop.f32.mrf.mxu0
        %v620 = vpop.f32.mrf.mxu0
        %621 = vdwg.mxu0
        %622 = vmatprep.subr.bf16.mxu0 0
        %623 = vmatpush1.bf16.msra.mxu0 0
        %624 = vmatprep.subr.bf16.mxu0 0
        %625 = vmatpush1.bf16.msra.mxu0 0
        %626 = vmatprep.subr.bf16.mxu0 0
        %627 = vmatpush1.bf16.msra.mxu0 0
        %628 = vmatprep.subr.bf16.mxu0 0
        %629 = vmatpush1.bf16.msra.mxu0 0
        %630 = vmatprep.subr.bf16.mxu0 0
        %631 = vmatpush1.bf16.msra.mxu0 0
        %632 = vmatprep.subr.bf16.mxu0 0
        %633 = vmatpush1.bf16.msra.mxu0 0
        %634 = vmatprep.subr.bf16.mxu0 0
        %635 = vmatpush1.bf16.msra.mxu0 0
        %636 = vmatprep.subr.bf16.mxu0 %v529
        %637 = vmatpush1.bf16.msra.mxu0 %v526
        %638 = vmatprep.subr.bf16.mxu0 0
        %639 = vmatpush2.bf16.msra.mxu0 0
        %640 = vmatprep.subr.bf16.mxu0 0
        %641 = vmatpush2.bf16.msra.mxu0 0
        %642 = vmatprep.subr.bf16.mxu0 0
        %643 = vmatpush2.bf16.msra.mxu0 0
        %644 = vmatprep.subr.bf16.mxu0 0
        %645 = vmatpush2.bf16.msra.mxu0 0
        %646 = vmatprep.subr.bf16.mxu0 0
        %647 = vmatpush2.bf16.msra.mxu0 0
        %648 = vmatprep.subr.bf16.mxu0 0
        %649 = vmatpush2.bf16.msra.mxu0 0
        %650 = vmatprep.subr.bf16.mxu0 0
        %651 = vmatpush2.bf16.msra.mxu0 0
        %652 = vmatprep.subr.bf16.mxu0 0
        %653 = vmatpush2.bf16.msra.mxu0 0
        %654 = vmatprep.mubr.bf16.mxu0 0
        %655 = vmatmul.mubr.bf16.gmra.mxu0 %v511
        %v656 = vpop.f32.mrf.mxu0
        %v657 = vadd.f32 %v423, %v656
        %v658 = vpop.f32.mrf.mxu0
        %v659 = vadd.f32 %v425, %v658
        %v660 = vpop.f32.mrf.mxu0
        %v661 = vpop.f32.mrf.mxu0
        %662 = vdwg.mxu0
        %663 = vmatprep.subr.bf16.mxu0 0
        %664 = vmatpush1.bf16.msra.mxu0 0
        %665 = vmatprep.subr.bf16.mxu0 0
        %666 = vmatpush1.bf16.msra.mxu0 0
        %667 = vmatprep.subr.bf16.mxu0 0
        %668 = vmatpush1.bf16.msra.mxu0 0
        %669 = vmatprep.subr.bf16.mxu0 0
        %670 = vmatpush1.bf16.msra.mxu0 0
        %671 = vmatprep.subr.bf16.mxu0 0
        %672 = vmatpush1.bf16.msra.mxu0 0
        %673 = vmatprep.subr.bf16.mxu0 0
        %674 = vmatpush1.bf16.msra.mxu0 0
        %675 = vmatprep.subr.bf16.mxu0 0
        %676 = vmatpush1.bf16.msra.mxu0 0
        %677 = vmatprep.subr.bf16.mxu0 %v535
        %678 = vmatpush1.bf16.msra.mxu0 %v532
        %679 = vmatprep.subr.bf16.mxu0 0
        %680 = vmatpush2.bf16.msra.mxu0 0
        %681 = vmatprep.subr.bf16.mxu0 0
        %682 = vmatpush2.bf16.msra.mxu0 0
        %683 = vmatprep.subr.bf16.mxu0 0
        %684 = vmatpush2.bf16.msra.mxu0 0
        %685 = vmatprep.subr.bf16.mxu0 0
        %686 = vmatpush2.bf16.msra.mxu0 0
        %687 = vmatprep.subr.bf16.mxu0 0
        %688 = vmatpush2.bf16.msra.mxu0 0
        %689 = vmatprep.subr.bf16.mxu0 0
        %690 = vmatpush2.bf16.msra.mxu0 0
        %691 = vmatprep.subr.bf16.mxu0 0
        %692 = vmatpush2.bf16.msra.mxu0 0
        %693 = vmatprep.subr.bf16.mxu0 0
        %694 = vmatpush2.bf16.msra.mxu0 0
        %695 = vmatprep.mubr.bf16.mxu0 0
        %696 = vmatmul.mubr.bf16.gmra.mxu0 %v511
        %v697 = vpop.f32.mrf.mxu0
        %v698 = vadd.f32 %v464, %v697
        %v699 = vpop.f32.mrf.mxu0
        %v700 = vadd.f32 %v466, %v699
        %v701 = vpop.f32.mrf.mxu0
        %v702 = vpop.f32.mrf.mxu0
        %703 = vdwg.mxu0
        %704 = vmatprep.subr.bf16.mxu0 0
        %705 = vmatpush1.bf16.msra.mxu0 0
        %706 = vmatprep.subr.bf16.mxu0 0
        %707 = vmatpush1.bf16.msra.mxu0 0
        %708 = vmatprep.subr.bf16.mxu0 0
        %709 = vmatpush1.bf16.msra.mxu0 0
        %710 = vmatprep.subr.bf16.mxu0 0
        %711 = vmatpush1.bf16.msra.mxu0 0
        %712 = vmatprep.subr.bf16.mxu0 0
        %713 = vmatpush1.bf16.msra.mxu0 0
        %714 = vmatprep.subr.bf16.mxu0 0
        %715 = vmatpush1.bf16.msra.mxu0 0
        %716 = vmatprep.subr.bf16.mxu0 0
        %717 = vmatpush1.bf16.msra.mxu0 0
        %718 = vmatprep.subr.bf16.mxu0 0
        %719 = vmatpush1.bf16.msra.mxu0 %v538
        %720 = vmatprep.subr.bf16.mxu0 0
        %721 = vmatpush2.bf16.msra.mxu0 0
        %722 = vmatprep.subr.bf16.mxu0 0
        %723 = vmatpush2.bf16.msra.mxu0 0
        %724 = vmatprep.subr.bf16.mxu0 0
        %725 = vmatpush2.bf16.msra.mxu0 0
        %726 = vmatprep.subr.bf16.mxu0 0
        %727 = vmatpush2.bf16.msra.mxu0 0
        %728 = vmatprep.subr.bf16.mxu0 0
        %729 = vmatpush2.bf16.msra.mxu0 0
        %730 = vmatprep.subr.bf16.mxu0 0
        %731 = vmatpush2.bf16.msra.mxu0 0
        %732 = vmatprep.subr.bf16.mxu0 0
        %733 = vmatpush2.bf16.msra.mxu0 0
        %734 = vmatprep.subr.bf16.mxu0 0
        %735 = vmatpush2.bf16.msra.mxu0 0
        %736 = vmatprep.mubr.bf16.mxu0 0
        %737 = vmatmul.mubr.bf16.gmra.mxu0 %v511
        %v738 = vpop.f32.mrf.mxu0
        %v739 = vadd.f32 %v505, %v738
        %v740 = vpop.f32.mrf.mxu0
        %v741 = vpop.f32.mrf.mxu0
        %v742 = vpop.f32.mrf.mxu0
        %743 = vdwg.mxu0
        %s744 = scalar_lea.vmem %s1, 8
        %v745 = vld [vmem:[%s744] sm:$0xf]
        %746 = vrot.lane.b32.xlu0 %v213, 126
        %v747 = vpop.permute.xlu0 %746
        %748 = vrot.lane.b32.xlu0 %v221, 126
        %v749 = vpop.permute.xlu0 %748
        %750 = vrot.lane.b32.xlu0 %v220, 126
        %v751 = vpop.permute.xlu0 %750
        %752 = vrot.lane.b32.xlu0 %v222, 126
        %v753 = vpop.permute.xlu0 %752
        %754 = vrot.lane.b32.xlu0 %v230, 126
        %v755 = vpop.permute.xlu0 %754
        %756 = vrot.lane.b32.xlu0 %v238, 126
        %v757 = vpop.permute.xlu0 %756
        %758 = vrot.lane.b32.xlu0 %v237, 126
        %v759 = vpop.permute.xlu0 %758
        %760 = vrot.lane.b32.xlu0 %v239, 126
        %v761 = vpop.permute.xlu0 %760
        %762 = vrot.lane.b32.xlu0 %v246, 126
        %v763 = vpop.permute.xlu0 %762
        %vm764 = vcmask 1031168
        %v765 = vsel %vm764, %v747, %v749
        %v766 = vsel %vm764, %v749, %v751
        %v767 = vsel %vm764, %v751, %v753
        %v768 = vsel %vm764, %v753, %v755
        %v769 = vsel %vm764, %v755, %v757
        %v770 = vsel %vm764, %v757, %v759
        %v771 = vsel %vm764, %v759, %v761
        %v772 = vsel %vm764, %v761, %v763
        %v774 = vsel %vm274, %v745, 0
        %v777 = vsel %vm278, %v765, 0
        %v780 = vsel %vm278, %v766, 0
        %v783 = vsel %vm278, %v767, 0
        %v786 = vsel %vm278, %v768, 0
        %v789 = vsel %vm278, %v769, 0
        %v792 = vsel %vm278, %v770, 0
        %v795 = vsel %vm278, %v771, 0
        %v798 = vsel %vm278, %v772, 0
        %v801 = vsel %vm278, %v763, 0
        %803 = vmatprep.subr.bf16.mxu0 0
        %804 = vmatpush1.bf16.msra.mxu0 0
        %805 = vmatprep.subr.bf16.mxu0 0
        %806 = vmatpush1.bf16.msra.mxu0 0
        %807 = vmatprep.subr.bf16.mxu0 0
        %808 = vmatpush1.bf16.msra.mxu0 0
        %809 = vmatprep.subr.bf16.mxu0 0
        %810 = vmatpush1.bf16.msra.mxu0 0
        %811 = vmatprep.subr.bf16.mxu0 0
        %812 = vmatpush1.bf16.msra.mxu0 0
        %813 = vmatprep.subr.bf16.mxu0 0
        %814 = vmatpush1.bf16.msra.mxu0 0
        %815 = vmatprep.subr.bf16.mxu0 0
        %816 = vmatpush1.bf16.msra.mxu0 0
        %817 = vmatprep.subr.bf16.mxu0 %v780
        %818 = vmatpush1.bf16.msra.mxu0 %v777
        %819 = vmatprep.subr.bf16.mxu0 0
        %820 = vmatpush2.bf16.msra.mxu0 0
        %821 = vmatprep.subr.bf16.mxu0 0
        %822 = vmatpush2.bf16.msra.mxu0 0
        %823 = vmatprep.subr.bf16.mxu0 0
        %824 = vmatpush2.bf16.msra.mxu0 0
        %825 = vmatprep.subr.bf16.mxu0 0
        %826 = vmatpush2.bf16.msra.mxu0 0
        %827 = vmatprep.subr.bf16.mxu0 0
        %828 = vmatpush2.bf16.msra.mxu0 0
        %829 = vmatprep.subr.bf16.mxu0 0
        %830 = vmatpush2.bf16.msra.mxu0 0
        %831 = vmatprep.subr.bf16.mxu0 0
        %832 = vmatpush2.bf16.msra.mxu0 0
        %833 = vmatprep.subr.bf16.mxu0 0
        %834 = vmatpush2.bf16.msra.mxu0 0
        %835 = vmatprep.mubr.bf16.mxu0 0
        %836 = vmatmul.mubr.bf16.gmra.mxu0 %v774
        %v837 = vpop.f32.mrf.mxu0
        %v838 = vadd.f32 0.0, %v837
        %v839 = vpop.f32.mrf.mxu0
        %v840 = vadd.f32 0.0, %v839
        %v841 = vpop.f32.mrf.mxu0
        %v842 = vpop.f32.mrf.mxu0
        %843 = vdwg.mxu0
        %844 = vmatprep.subr.bf16.mxu0 0
        %845 = vmatpush1.bf16.msra.mxu0 0
        %846 = vmatprep.subr.bf16.mxu0 0
        %847 = vmatpush1.bf16.msra.mxu0 0
        %848 = vmatprep.subr.bf16.mxu0 0
        %849 = vmatpush1.bf16.msra.mxu0 0
        %850 = vmatprep.subr.bf16.mxu0 0
        %851 = vmatpush1.bf16.msra.mxu0 0
        %852 = vmatprep.subr.bf16.mxu0 0
        %853 = vmatpush1.bf16.msra.mxu0 0
        %854 = vmatprep.subr.bf16.mxu0 0
        %855 = vmatpush1.bf16.msra.mxu0 0
        %856 = vmatprep.subr.bf16.mxu0 0
        %857 = vmatpush1.bf16.msra.mxu0 0
        %858 = vmatprep.subr.bf16.mxu0 %v786
        %859 = vmatpush1.bf16.msra.mxu0 %v783
        %860 = vmatprep.subr.bf16.mxu0 0
        %861 = vmatpush2.bf16.msra.mxu0 0
        %862 = vmatprep.subr.bf16.mxu0 0
        %863 = vmatpush2.bf16.msra.mxu0 0
        %864 = vmatprep.subr.bf16.mxu0 0
        %865 = vmatpush2.bf16.msra.mxu0 0
        %866 = vmatprep.subr.bf16.mxu0 0
        %867 = vmatpush2.bf16.msra.mxu0 0
        %868 = vmatprep.subr.bf16.mxu0 0
        %869 = vmatpush2.bf16.msra.mxu0 0
        %870 = vmatprep.subr.bf16.mxu0 0
        %871 = vmatpush2.bf16.msra.mxu0 0
        %872 = vmatprep.subr.bf16.mxu0 0
        %873 = vmatpush2.bf16.msra.mxu0 0
        %874 = vmatprep.subr.bf16.mxu0 0
        %875 = vmatpush2.bf16.msra.mxu0 0
        %876 = vmatprep.mubr.bf16.mxu0 0
        %877 = vmatmul.mubr.bf16.gmra.mxu0 %v774
        %v878 = vpop.f32.mrf.mxu0
        %v879 = vadd.f32 0.0, %v878
        %v880 = vpop.f32.mrf.mxu0
        %v881 = vadd.f32 0.0, %v880
        %v882 = vpop.f32.mrf.mxu0
        %v883 = vpop.f32.mrf.mxu0
        %884 = vdwg.mxu0
        %885 = vmatprep.subr.bf16.mxu0 0
        %886 = vmatpush1.bf16.msra.mxu0 0
        %887 = vmatprep.subr.bf16.mxu0 0
        %888 = vmatpush1.bf16.msra.mxu0 0
        %889 = vmatprep.subr.bf16.mxu0 0
        %890 = vmatpush1.bf16.msra.mxu0 0
        %891 = vmatprep.subr.bf16.mxu0 0
        %892 = vmatpush1.bf16.msra.mxu0 0
        %893 = vmatprep.subr.bf16.mxu0 0
        %894 = vmatpush1.bf16.msra.mxu0 0
        %895 = vmatprep.subr.bf16.mxu0 0
        %896 = vmatpush1.bf16.msra.mxu0 0
        %897 = vmatprep.subr.bf16.mxu0 0
        %898 = vmatpush1.bf16.msra.mxu0 0
        %899 = vmatprep.subr.bf16.mxu0 %v792
        %900 = vmatpush1.bf16.msra.mxu0 %v789
        %901 = vmatprep.subr.bf16.mxu0 0
        %902 = vmatpush2.bf16.msra.mxu0 0
        %903 = vmatprep.subr.bf16.mxu0 0
        %904 = vmatpush2.bf16.msra.mxu0 0
        %905 = vmatprep.subr.bf16.mxu0 0
        %906 = vmatpush2.bf16.msra.mxu0 0
        %907 = vmatprep.subr.bf16.mxu0 0
        %908 = vmatpush2.bf16.msra.mxu0 0
        %909 = vmatprep.subr.bf16.mxu0 0
        %910 = vmatpush2.bf16.msra.mxu0 0
        %911 = vmatprep.subr.bf16.mxu0 0
        %912 = vmatpush2.bf16.msra.mxu0 0
        %913 = vmatprep.subr.bf16.mxu0 0
        %914 = vmatpush2.bf16.msra.mxu0 0
        %915 = vmatprep.subr.bf16.mxu0 0
        %916 = vmatpush2.bf16.msra.mxu0 0
        %917 = vmatprep.mubr.bf16.mxu0 0
        %918 = vmatmul.mubr.bf16.gmra.mxu0 %v774
        %v919 = vpop.f32.mrf.mxu0
        %v920 = vadd.f32 0.0, %v919
        %v921 = vpop.f32.mrf.mxu0
        %v922 = vadd.f32 0.0, %v921
        %v923 = vpop.f32.mrf.mxu0
        %v924 = vpop.f32.mrf.mxu0
        %925 = vdwg.mxu0
        %926 = vmatprep.subr.bf16.mxu0 0
        %927 = vmatpush1.bf16.msra.mxu0 0
        %928 = vmatprep.subr.bf16.mxu0 0
        %929 = vmatpush1.bf16.msra.mxu0 0
        %930 = vmatprep.subr.bf16.mxu0 0
        %931 = vmatpush1.bf16.msra.mxu0 0
        %932 = vmatprep.subr.bf16.mxu0 0
        %933 = vmatpush1.bf16.msra.mxu0 0
        %934 = vmatprep.subr.bf16.mxu0 0
        %935 = vmatpush1.bf16.msra.mxu0 0
        %936 = vmatprep.subr.bf16.mxu0 0
        %937 = vmatpush1.bf16.msra.mxu0 0
        %938 = vmatprep.subr.bf16.mxu0 0
        %939 = vmatpush1.bf16.msra.mxu0 0
        %940 = vmatprep.subr.bf16.mxu0 %v798
        %941 = vmatpush1.bf16.msra.mxu0 %v795
        %942 = vmatprep.subr.bf16.mxu0 0
        %943 = vmatpush2.bf16.msra.mxu0 0
        %944 = vmatprep.subr.bf16.mxu0 0
        %945 = vmatpush2.bf16.msra.mxu0 0
        %946 = vmatprep.subr.bf16.mxu0 0
        %947 = vmatpush2.bf16.msra.mxu0 0
        %948 = vmatprep.subr.bf16.mxu0 0
        %949 = vmatpush2.bf16.msra.mxu0 0
        %950 = vmatprep.subr.bf16.mxu0 0
        %951 = vmatpush2.bf16.msra.mxu0 0
        %952 = vmatprep.subr.bf16.mxu0 0
        %953 = vmatpush2.bf16.msra.mxu0 0
        %954 = vmatprep.subr.bf16.mxu0 0
        %955 = vmatpush2.bf16.msra.mxu0 0
        %956 = vmatprep.subr.bf16.mxu0 0
        %957 = vmatpush2.bf16.msra.mxu0 0
        %958 = vmatprep.mubr.bf16.mxu0 0
        %959 = vmatmul.mubr.bf16.gmra.mxu0 %v774
        %v960 = vpop.f32.mrf.mxu0
        %v961 = vadd.f32 0.0, %v960
        %v962 = vpop.f32.mrf.mxu0
        %v963 = vadd.f32 0.0, %v962
        %v964 = vpop.f32.mrf.mxu0
        %v965 = vpop.f32.mrf.mxu0
        %966 = vdwg.mxu0
        %967 = vmatprep.subr.bf16.mxu0 0
        %968 = vmatpush1.bf16.msra.mxu0 0
        %969 = vmatprep.subr.bf16.mxu0 0
        %970 = vmatpush1.bf16.msra.mxu0 0
        %971 = vmatprep.subr.bf16.mxu0 0
        %972 = vmatpush1.bf16.msra.mxu0 0
        %973 = vmatprep.subr.bf16.mxu0 0
        %974 = vmatpush1.bf16.msra.mxu0 0
        %975 = vmatprep.subr.bf16.mxu0 0
        %976 = vmatpush1.bf16.msra.mxu0 0
        %977 = vmatprep.subr.bf16.mxu0 0
        %978 = vmatpush1.bf16.msra.mxu0 0
        %979 = vmatprep.subr.bf16.mxu0 0
        %980 = vmatpush1.bf16.msra.mxu0 0
        %981 = vmatprep.subr.bf16.mxu0 0
        %982 = vmatpush1.bf16.msra.mxu0 %v801
        %983 = vmatprep.subr.bf16.mxu0 0
        %984 = vmatpush2.bf16.msra.mxu0 0
        %985 = vmatprep.subr.bf16.mxu0 0
        %986 = vmatpush2.bf16.msra.mxu0 0
        %987 = vmatprep.subr.bf16.mxu0 0
        %988 = vmatpush2.bf16.msra.mxu0 0
        %989 = vmatprep.subr.bf16.mxu0 0
        %990 = vmatpush2.bf16.msra.mxu0 0
        %991 = vmatprep.subr.bf16.mxu0 0
        %992 = vmatpush2.bf16.msra.mxu0 0
        %993 = vmatprep.subr.bf16.mxu0 0
        %994 = vmatpush2.bf16.msra.mxu0 0
        %995 = vmatprep.subr.bf16.mxu0 0
        %996 = vmatpush2.bf16.msra.mxu0 0
        %997 = vmatprep.subr.bf16.mxu0 0
        %998 = vmatpush2.bf16.msra.mxu0 0
        %999 = vmatprep.mubr.bf16.mxu0 0
        %1000 = vmatmul.mubr.bf16.gmra.mxu0 %v774
        %v1001 = vpop.f32.mrf.mxu0
        %v1002 = vadd.f32 0.0, %v1001
        %v1003 = vpop.f32.mrf.mxu0
        %v1004 = vpop.f32.mrf.mxu0
        %v1005 = vpop.f32.mrf.mxu0
        %1006 = vdwg.mxu0
        %v1007 = vadd.f32 %v575, %v838
        %v1008 = vadd.f32 %v577, %v840
        %v1009 = vadd.f32 %v616, %v879
        %v1010 = vadd.f32 %v618, %v881
        %v1011 = vadd.f32 %v657, %v920
        %v1012 = vadd.f32 %v659, %v922
        %v1013 = vadd.f32 %v698, %v961
        %v1014 = vadd.f32 %v700, %v963
        %v1015 = vadd.f32 %v739, %v1002
        %s1016 = scalar_lea.vmem %s1, 12
        %v1017 = vld [vmem:[%s1016] sm:$0xf]
        %1018 = vrot.lane.b32.xlu0 %v213, 94
        %v1019 = vpop.permute.xlu0 %1018
        %1020 = vrot.lane.b32.xlu0 %v221, 94
        %v1021 = vpop.permute.xlu0 %1020
        %1022 = vrot.lane.b32.xlu0 %v220, 94
        %v1023 = vpop.permute.xlu0 %1022
        %1024 = vrot.lane.b32.xlu0 %v222, 94
        %v1025 = vpop.permute.xlu0 %1024
        %1026 = vrot.lane.b32.xlu0 %v230, 94
        %v1027 = vpop.permute.xlu0 %1026
        %1028 = vrot.lane.b32.xlu0 %v238, 94
        %v1029 = vpop.permute.xlu0 %1028
        %1030 = vrot.lane.b32.xlu0 %v237, 94
        %v1031 = vpop.permute.xlu0 %1030
        %1032 = vrot.lane.b32.xlu0 %v239, 94
        %v1033 = vpop.permute.xlu0 %1032
        %1034 = vrot.lane.b32.xlu0 %v246, 94
        %v1035 = vpop.permute.xlu0 %1034
        %vm1036 = vcmask 769024
        %v1037 = vsel %vm1036, %v1019, %v1021
        %v1038 = vsel %vm1036, %v1021, %v1023
        %v1039 = vsel %vm1036, %v1023, %v1025
        %v1040 = vsel %vm1036, %v1025, %v1027
        %v1041 = vsel %vm1036, %v1027, %v1029
        %v1042 = vsel %vm1036, %v1029, %v1031
        %v1043 = vsel %vm1036, %v1031, %v1033
        %v1044 = vsel %vm1036, %v1033, %v1035
        %v1046 = vsel %vm274, %v1017, 0
        %v1049 = vsel %vm278, %v1037, 0
        %v1052 = vsel %vm278, %v1038, 0
        %v1055 = vsel %vm278, %v1039, 0
        %v1058 = vsel %vm278, %v1040, 0
        %v1061 = vsel %vm278, %v1041, 0
        %v1064 = vsel %vm278, %v1042, 0
        %v1067 = vsel %vm278, %v1043, 0
        %v1070 = vsel %vm278, %v1044, 0
        %v1073 = vsel %vm278, %v1035, 0
        %1075 = vmatprep.subr.bf16.mxu0 0
        %1076 = vmatpush1.bf16.msra.mxu0 0
        %1077 = vmatprep.subr.bf16.mxu0 0
        %1078 = vmatpush1.bf16.msra.mxu0 0
        %1079 = vmatprep.subr.bf16.mxu0 0
        %1080 = vmatpush1.bf16.msra.mxu0 0
        %1081 = vmatprep.subr.bf16.mxu0 0
        %1082 = vmatpush1.bf16.msra.mxu0 0
        %1083 = vmatprep.subr.bf16.mxu0 0
        %1084 = vmatpush1.bf16.msra.mxu0 0
        %1085 = vmatprep.subr.bf16.mxu0 0
        %1086 = vmatpush1.bf16.msra.mxu0 0
        %1087 = vmatprep.subr.bf16.mxu0 0
        %1088 = vmatpush1.bf16.msra.mxu0 0
        %1089 = vmatprep.subr.bf16.mxu0 %v1052
        %1090 = vmatpush1.bf16.msra.mxu0 %v1049
        %1091 = vmatprep.subr.bf16.mxu0 0
        %1092 = vmatpush2.bf16.msra.mxu0 0
        %1093 = vmatprep.subr.bf16.mxu0 0
        %1094 = vmatpush2.bf16.msra.mxu0 0
        %1095 = vmatprep.subr.bf16.mxu0 0
        %1096 = vmatpush2.bf16.msra.mxu0 0
        %1097 = vmatprep.subr.bf16.mxu0 0
        %1098 = vmatpush2.bf16.msra.mxu0 0
        %1099 = vmatprep.subr.bf16.mxu0 0
        %1100 = vmatpush2.bf16.msra.mxu0 0
        %1101 = vmatprep.subr.bf16.mxu0 0
        %1102 = vmatpush2.bf16.msra.mxu0 0
        %1103 = vmatprep.subr.bf16.mxu0 0
        %1104 = vmatpush2.bf16.msra.mxu0 0
        %1105 = vmatprep.subr.bf16.mxu0 0
        %1106 = vmatpush2.bf16.msra.mxu0 0
        %1107 = vmatprep.mubr.bf16.mxu0 0
        %1108 = vmatmul.mubr.bf16.gmra.mxu0 %v1046
        %v1109 = vpop.f32.mrf.mxu0
        %v1110 = vadd.f32 0.0, %v1109
        %v1111 = vpop.f32.mrf.mxu0
        %v1112 = vadd.f32 0.0, %v1111
        %v1113 = vpop.f32.mrf.mxu0
        %v1114 = vpop.f32.mrf.mxu0
        %1115 = vdwg.mxu0
        %1116 = vmatprep.subr.bf16.mxu0 0
        %1117 = vmatpush1.bf16.msra.mxu0 0
        %1118 = vmatprep.subr.bf16.mxu0 0
        %1119 = vmatpush1.bf16.msra.mxu0 0
        %1120 = vmatprep.subr.bf16.mxu0 0
        %1121 = vmatpush1.bf16.msra.mxu0 0
        %1122 = vmatprep.subr.bf16.mxu0 0
        %1123 = vmatpush1.bf16.msra.mxu0 0
        %1124 = vmatprep.subr.bf16.mxu0 0
        %1125 = vmatpush1.bf16.msra.mxu0 0
        %1126 = vmatprep.subr.bf16.mxu0 0
        %1127 = vmatpush1.bf16.msra.mxu0 0
        %1128 = vmatprep.subr.bf16.mxu0 0
        %1129 = vmatpush1.bf16.msra.mxu0 0
        %1130 = vmatprep.subr.bf16.mxu0 %v1058
        %1131 = vmatpush1.bf16.msra.mxu0 %v1055
        %1132 = vmatprep.subr.bf16.mxu0 0
        %1133 = vmatpush2.bf16.msra.mxu0 0
        %1134 = vmatprep.subr.bf16.mxu0 0
        %1135 = vmatpush2.bf16.msra.mxu0 0
        %1136 = vmatprep.subr.bf16.mxu0 0
        %1137 = vmatpush2.bf16.msra.mxu0 0
        %1138 = vmatprep.subr.bf16.mxu0 0
        %1139 = vmatpush2.bf16.msra.mxu0 0
        %1140 = vmatprep.subr.bf16.mxu0 0
        %1141 = vmatpush2.bf16.msra.mxu0 0
        %1142 = vmatprep.subr.bf16.mxu0 0
        %1143 = vmatpush2.bf16.msra.mxu0 0
        %1144 = vmatprep.subr.bf16.mxu0 0
        %1145 = vmatpush2.bf16.msra.mxu0 0
        %1146 = vmatprep.subr.bf16.mxu0 0
        %1147 = vmatpush2.bf16.msra.mxu0 0
        %1148 = vmatprep.mubr.bf16.mxu0 0
        %1149 = vmatmul.mubr.bf16.gmra.mxu0 %v1046
        %v1150 = vpop.f32.mrf.mxu0
        %v1151 = vadd.f32 0.0, %v1150
        %v1152 = vpop.f32.mrf.mxu0
        %v1153 = vadd.f32 0.0, %v1152
        %v1154 = vpop.f32.mrf.mxu0
        %v1155 = vpop.f32.mrf.mxu0
        %1156 = vdwg.mxu0
        %1157 = vmatprep.subr.bf16.mxu0 0
        %1158 = vmatpush1.bf16.msra.mxu0 0
        %1159 = vmatprep.subr.bf16.mxu0 0
        %1160 = vmatpush1.bf16.msra.mxu0 0
        %1161 = vmatprep.subr.bf16.mxu0 0
        %1162 = vmatpush1.bf16.msra.mxu0 0
        %1163 = vmatprep.subr.bf16.mxu0 0
        %1164 = vmatpush1.bf16.msra.mxu0 0
        %1165 = vmatprep.subr.bf16.mxu0 0
        %1166 = vmatpush1.bf16.msra.mxu0 0
        %1167 = vmatprep.subr.bf16.mxu0 0
        %1168 = vmatpush1.bf16.msra.mxu0 0
        %1169 = vmatprep.subr.bf16.mxu0 0
        %1170 = vmatpush1.bf16.msra.mxu0 0
        %1171 = vmatprep.subr.bf16.mxu0 %v1064
        %1172 = vmatpush1.bf16.msra.mxu0 %v1061
        %1173 = vmatprep.subr.bf16.mxu0 0
        %1174 = vmatpush2.bf16.msra.mxu0 0
        %1175 = vmatprep.subr.bf16.mxu0 0
        %1176 = vmatpush2.bf16.msra.mxu0 0
        %1177 = vmatprep.subr.bf16.mxu0 0
        %1178 = vmatpush2.bf16.msra.mxu0 0
        %1179 = vmatprep.subr.bf16.mxu0 0
        %1180 = vmatpush2.bf16.msra.mxu0 0
        %1181 = vmatprep.subr.bf16.mxu0 0
        %1182 = vmatpush2.bf16.msra.mxu0 0
        %1183 = vmatprep.subr.bf16.mxu0 0
        %1184 = vmatpush2.bf16.msra.mxu0 0
        %1185 = vmatprep.subr.bf16.mxu0 0
        %1186 = vmatpush2.bf16.msra.mxu0 0
        %1187 = vmatprep.subr.bf16.mxu0 0
        %1188 = vmatpush2.bf16.msra.mxu0 0
        %1189 = vmatprep.mubr.bf16.mxu0 0
        %1190 = vmatmul.mubr.bf16.gmra.mxu0 %v1046
        %v1191 = vpop.f32.mrf.mxu0
        %v1192 = vadd.f32 0.0, %v1191
        %v1193 = vpop.f32.mrf.mxu0
        %v1194 = vadd.f32 0.0, %v1193
        %v1195 = vpop.f32.mrf.mxu0
        %v1196 = vpop.f32.mrf.mxu0
        %1197 = vdwg.mxu0
        %1198 = vmatprep.subr.bf16.mxu0 0
        %1199 = vmatpush1.bf16.msra.mxu0 0
        %1200 = vmatprep.subr.bf16.mxu0 0
        %1201 = vmatpush1.bf16.msra.mxu0 0
        %1202 = vmatprep.subr.bf16.mxu0 0
        %1203 = vmatpush1.bf16.msra.mxu0 0
        %1204 = vmatprep.subr.bf16.mxu0 0
        %1205 = vmatpush1.bf16.msra.mxu0 0
        %1206 = vmatprep.subr.bf16.mxu0 0
        %1207 = vmatpush1.bf16.msra.mxu0 0
        %1208 = vmatprep.subr.bf16.mxu0 0
        %1209 = vmatpush1.bf16.msra.mxu0 0
        %1210 = vmatprep.subr.bf16.mxu0 0
        %1211 = vmatpush1.bf16.msra.mxu0 0
        %1212 = vmatprep.subr.bf16.mxu0 %v1070
        %1213 = vmatpush1.bf16.msra.mxu0 %v1067
        %1214 = vmatprep.subr.bf16.mxu0 0
        %1215 = vmatpush2.bf16.msra.mxu0 0
        %1216 = vmatprep.subr.bf16.mxu0 0
        %1217 = vmatpush2.bf16.msra.mxu0 0
        %1218 = vmatprep.subr.bf16.mxu0 0
        %1219 = vmatpush2.bf16.msra.mxu0 0
        %1220 = vmatprep.subr.bf16.mxu0 0
        %1221 = vmatpush2.bf16.msra.mxu0 0
        %1222 = vmatprep.subr.bf16.mxu0 0
        %1223 = vmatpush2.bf16.msra.mxu0 0
        %1224 = vmatprep.subr.bf16.mxu0 0
        %1225 = vmatpush2.bf16.msra.mxu0 0
        %1226 = vmatprep.subr.bf16.mxu0 0
        %1227 = vmatpush2.bf16.msra.mxu0 0
        %1228 = vmatprep.subr.bf16.mxu0 0
        %1229 = vmatpush2.bf16.msra.mxu0 0
        %1230 = vmatprep.mubr.bf16.mxu0 0
        %1231 = vmatmul.mubr.bf16.gmra.mxu0 %v1046
        %v1232 = vpop.f32.mrf.mxu0
        %v1233 = vadd.f32 0.0, %v1232
        %v1234 = vpop.f32.mrf.mxu0
        %v1235 = vadd.f32 0.0, %v1234
        %v1236 = vpop.f32.mrf.mxu0
        %v1237 = vpop.f32.mrf.mxu0
        %1238 = vdwg.mxu0
        %1239 = vmatprep.subr.bf16.mxu0 0
        %1240 = vmatpush1.bf16.msra.mxu0 0
        %1241 = vmatprep.subr.bf16.mxu0 0
        %1242 = vmatpush1.bf16.msra.mxu0 0
        %1243 = vmatprep.subr.bf16.mxu0 0
        %1244 = vmatpush1.bf16.msra.mxu0 0
        %1245 = vmatprep.subr.bf16.mxu0 0
        %1246 = vmatpush1.bf16.msra.mxu0 0
        %1247 = vmatprep.subr.bf16.mxu0 0
        %1248 = vmatpush1.bf16.msra.mxu0 0
        %1249 = vmatprep.subr.bf16.mxu0 0
        %1250 = vmatpush1.bf16.msra.mxu0 0
        %1251 = vmatprep.subr.bf16.mxu0 0
        %1252 = vmatpush1.bf16.msra.mxu0 0
        %1253 = vmatprep.subr.bf16.mxu0 0
        %1254 = vmatpush1.bf16.msra.mxu0 %v1073
        %1255 = vmatprep.subr.bf16.mxu0 0
        %1256 = vmatpush2.bf16.msra.mxu0 0
        %1257 = vmatprep.subr.bf16.mxu0 0
        %1258 = vmatpush2.bf16.msra.mxu0 0
        %1259 = vmatprep.subr.bf16.mxu0 0
        %1260 = vmatpush2.bf16.msra.mxu0 0
        %1261 = vmatprep.subr.bf16.mxu0 0
        %1262 = vmatpush2.bf16.msra.mxu0 0
        %1263 = vmatprep.subr.bf16.mxu0 0
        %1264 = vmatpush2.bf16.msra.mxu0 0
        %1265 = vmatprep.subr.bf16.mxu0 0
        %1266 = vmatpush2.bf16.msra.mxu0 0
        %1267 = vmatprep.subr.bf16.mxu0 0
        %1268 = vmatpush2.bf16.msra.mxu0 0
        %1269 = vmatprep.subr.bf16.mxu0 0
        %1270 = vmatpush2.bf16.msra.mxu0 0
        %1271 = vmatprep.mubr.bf16.mxu0 0
        %1272 = vmatmul.mubr.bf16.gmra.mxu0 %v1046
        %v1273 = vpop.f32.mrf.mxu0
        %v1274 = vadd.f32 0.0, %v1273
        %v1275 = vpop.f32.mrf.mxu0
        %v1276 = vpop.f32.mrf.mxu0
        %v1277 = vpop.f32.mrf.mxu0
        %1278 = vdwg.mxu0
        %v1279 = vadd.f32 %v1007, %v1110
        %v1280 = vadd.f32 %v1008, %v1112
        %v1281 = vadd.f32 %v1009, %v1151
        %v1282 = vadd.f32 %v1010, %v1153
        %v1283 = vadd.f32 %v1011, %v1192
        %v1284 = vadd.f32 %v1012, %v1194
        %v1285 = vadd.f32 %v1013, %v1233
        %v1286 = vadd.f32 %v1014, %v1235
        %v1287 = vadd.f32 %v1015, %v1274
        %s1288 = scalar_lea.vmem %s1, 16
        %v1289 = vld [vmem:[%s1288] sm:$0xf]
        %1290 = vrot.lane.b32.xlu0 %v213, 93
        %v1291 = vpop.permute.xlu0 %1290
        %1292 = vrot.lane.b32.xlu0 %v221, 93
        %v1293 = vpop.permute.xlu0 %1292
        %1294 = vrot.lane.b32.xlu0 %v220, 93
        %v1295 = vpop.permute.xlu0 %1294
        %1296 = vrot.lane.b32.xlu0 %v222, 93
        %v1297 = vpop.permute.xlu0 %1296
        %1298 = vrot.lane.b32.xlu0 %v230, 93
        %v1299 = vpop.permute.xlu0 %1298
        %1300 = vrot.lane.b32.xlu0 %v238, 93
        %v1301 = vpop.permute.xlu0 %1300
        %1302 = vrot.lane.b32.xlu0 %v237, 93
        %v1303 = vpop.permute.xlu0 %1302
        %1304 = vrot.lane.b32.xlu0 %v239, 93
        %v1305 = vpop.permute.xlu0 %1304
        %1306 = vrot.lane.b32.xlu0 %v246, 93
        %v1307 = vpop.permute.xlu0 %1306
        %vm1308 = vcmask 760832
        %v1309 = vsel %vm1308, %v1291, %v1293
        %v1310 = vsel %vm1308, %v1293, %v1295
        %v1311 = vsel %vm1308, %v1295, %v1297
        %v1312 = vsel %vm1308, %v1297, %v1299
        %v1313 = vsel %vm1308, %v1299, %v1301
        %v1314 = vsel %vm1308, %v1301, %v1303
        %v1315 = vsel %vm1308, %v1303, %v1305
        %v1316 = vsel %vm1308, %v1305, %v1307
        %v1318 = vsel %vm274, %v1289, 0
        %v1321 = vsel %vm278, %v1309, 0
        %v1324 = vsel %vm278, %v1310, 0
        %v1327 = vsel %vm278, %v1311, 0
        %v1330 = vsel %vm278, %v1312, 0
        %v1333 = vsel %vm278, %v1313, 0
        %v1336 = vsel %vm278, %v1314, 0
        %v1339 = vsel %vm278, %v1315, 0
        %v1342 = vsel %vm278, %v1316, 0
        %v1345 = vsel %vm278, %v1307, 0
        %1347 = vmatprep.subr.bf16.mxu0 0
        %1348 = vmatpush1.bf16.msra.mxu0 0
        %1349 = vmatprep.subr.bf16.mxu0 0
        %1350 = vmatpush1.bf16.msra.mxu0 0
        %1351 = vmatprep.subr.bf16.mxu0 0
        %1352 = vmatpush1.bf16.msra.mxu0 0
        %1353 = vmatprep.subr.bf16.mxu0 0
        %1354 = vmatpush1.bf16.msra.mxu0 0
        %1355 = vmatprep.subr.bf16.mxu0 0
        %1356 = vmatpush1.bf16.msra.mxu0 0
        %1357 = vmatprep.subr.bf16.mxu0 0
        %1358 = vmatpush1.bf16.msra.mxu0 0
        %1359 = vmatprep.subr.bf16.mxu0 0
        %1360 = vmatpush1.bf16.msra.mxu0 0
        %1361 = vmatprep.subr.bf16.mxu0 %v1324
        %1362 = vmatpush1.bf16.msra.mxu0 %v1321
        %1363 = vmatprep.subr.bf16.mxu0 0
        %1364 = vmatpush2.bf16.msra.mxu0 0
        %1365 = vmatprep.subr.bf16.mxu0 0
        %1366 = vmatpush2.bf16.msra.mxu0 0
        %1367 = vmatprep.subr.bf16.mxu0 0
        %1368 = vmatpush2.bf16.msra.mxu0 0
        %1369 = vmatprep.subr.bf16.mxu0 0
        %1370 = vmatpush2.bf16.msra.mxu0 0
        %1371 = vmatprep.subr.bf16.mxu0 0
        %1372 = vmatpush2.bf16.msra.mxu0 0
        %1373 = vmatprep.subr.bf16.mxu0 0
        %1374 = vmatpush2.bf16.msra.mxu0 0
        %1375 = vmatprep.subr.bf16.mxu0 0
        %1376 = vmatpush2.bf16.msra.mxu0 0
        %1377 = vmatprep.subr.bf16.mxu0 0
        %1378 = vmatpush2.bf16.msra.mxu0 0
        %1379 = vmatprep.mubr.bf16.mxu0 0
        %1380 = vmatmul.mubr.bf16.gmra.mxu0 %v1318
        %v1381 = vpop.f32.mrf.mxu0
        %v1382 = vadd.f32 0.0, %v1381
        %v1383 = vpop.f32.mrf.mxu0
        %v1384 = vadd.f32 0.0, %v1383
        %v1385 = vpop.f32.mrf.mxu0
        %v1386 = vpop.f32.mrf.mxu0
        %1387 = vdwg.mxu0
        %1388 = vmatprep.subr.bf16.mxu0 0
        %1389 = vmatpush1.bf16.msra.mxu0 0
        %1390 = vmatprep.subr.bf16.mxu0 0
        %1391 = vmatpush1.bf16.msra.mxu0 0
        %1392 = vmatprep.subr.bf16.mxu0 0
        %1393 = vmatpush1.bf16.msra.mxu0 0
        %1394 = vmatprep.subr.bf16.mxu0 0
        %1395 = vmatpush1.bf16.msra.mxu0 0
        %1396 = vmatprep.subr.bf16.mxu0 0
        %1397 = vmatpush1.bf16.msra.mxu0 0
        %1398 = vmatprep.subr.bf16.mxu0 0
        %1399 = vmatpush1.bf16.msra.mxu0 0
        %1400 = vmatprep.subr.bf16.mxu0 0
        %1401 = vmatpush1.bf16.msra.mxu0 0
        %1402 = vmatprep.subr.bf16.mxu0 %v1330
        %1403 = vmatpush1.bf16.msra.mxu0 %v1327
        %1404 = vmatprep.subr.bf16.mxu0 0
        %1405 = vmatpush2.bf16.msra.mxu0 0
        %1406 = vmatprep.subr.bf16.mxu0 0
        %1407 = vmatpush2.bf16.msra.mxu0 0
        %1408 = vmatprep.subr.bf16.mxu0 0
        %1409 = vmatpush2.bf16.msra.mxu0 0
        %1410 = vmatprep.subr.bf16.mxu0 0
        %1411 = vmatpush2.bf16.msra.mxu0 0
        %1412 = vmatprep.subr.bf16.mxu0 0
        %1413 = vmatpush2.bf16.msra.mxu0 0
        %1414 = vmatprep.subr.bf16.mxu0 0
        %1415 = vmatpush2.bf16.msra.mxu0 0
        %1416 = vmatprep.subr.bf16.mxu0 0
        %1417 = vmatpush2.bf16.msra.mxu0 0
        %1418 = vmatprep.subr.bf16.mxu0 0
        %1419 = vmatpush2.bf16.msra.mxu0 0
        %1420 = vmatprep.mubr.bf16.mxu0 0
        %1421 = vmatmul.mubr.bf16.gmra.mxu0 %v1318
        %v1422 = vpop.f32.mrf.mxu0
        %v1423 = vadd.f32 0.0, %v1422
        %v1424 = vpop.f32.mrf.mxu0
        %v1425 = vadd.f32 0.0, %v1424
        %v1426 = vpop.f32.mrf.mxu0
        %v1427 = vpop.f32.mrf.mxu0
        %1428 = vdwg.mxu0
        %1429 = vmatprep.subr.bf16.mxu0 0
        %1430 = vmatpush1.bf16.msra.mxu0 0
        %1431 = vmatprep.subr.bf16.mxu0 0
        %1432 = vmatpush1.bf16.msra.mxu0 0
        %1433 = vmatprep.subr.bf16.mxu0 0
        %1434 = vmatpush1.bf16.msra.mxu0 0
        %1435 = vmatprep.subr.bf16.mxu0 0
        %1436 = vmatpush1.bf16.msra.mxu0 0
        %1437 = vmatprep.subr.bf16.mxu0 0
        %1438 = vmatpush1.bf16.msra.mxu0 0
        %1439 = vmatprep.subr.bf16.mxu0 0
        %1440 = vmatpush1.bf16.msra.mxu0 0
        %1441 = vmatprep.subr.bf16.mxu0 0
        %1442 = vmatpush1.bf16.msra.mxu0 0
        %1443 = vmatprep.subr.bf16.mxu0 %v1336
        %1444 = vmatpush1.bf16.msra.mxu0 %v1333
        %1445 = vmatprep.subr.bf16.mxu0 0
        %1446 = vmatpush2.bf16.msra.mxu0 0
        %1447 = vmatprep.subr.bf16.mxu0 0
        %1448 = vmatpush2.bf16.msra.mxu0 0
        %1449 = vmatprep.subr.bf16.mxu0 0
        %1450 = vmatpush2.bf16.msra.mxu0 0
        %1451 = vmatprep.subr.bf16.mxu0 0
        %1452 = vmatpush2.bf16.msra.mxu0 0
        %1453 = vmatprep.subr.bf16.mxu0 0
        %1454 = vmatpush2.bf16.msra.mxu0 0
        %1455 = vmatprep.subr.bf16.mxu0 0
        %1456 = vmatpush2.bf16.msra.mxu0 0
        %1457 = vmatprep.subr.bf16.mxu0 0
        %1458 = vmatpush2.bf16.msra.mxu0 0
        %1459 = vmatprep.subr.bf16.mxu0 0
        %1460 = vmatpush2.bf16.msra.mxu0 0
        %1461 = vmatprep.mubr.bf16.mxu0 0
        %1462 = vmatmul.mubr.bf16.gmra.mxu0 %v1318
        %v1463 = vpop.f32.mrf.mxu0
        %v1464 = vadd.f32 0.0, %v1463
        %v1465 = vpop.f32.mrf.mxu0
        %v1466 = vadd.f32 0.0, %v1465
        %v1467 = vpop.f32.mrf.mxu0
        %v1468 = vpop.f32.mrf.mxu0
        %1469 = vdwg.mxu0
        %1470 = vmatprep.subr.bf16.mxu0 0
        %1471 = vmatpush1.bf16.msra.mxu0 0
        %1472 = vmatprep.subr.bf16.mxu0 0
        %1473 = vmatpush1.bf16.msra.mxu0 0
        %1474 = vmatprep.subr.bf16.mxu0 0
        %1475 = vmatpush1.bf16.msra.mxu0 0
        %1476 = vmatprep.subr.bf16.mxu0 0
        %1477 = vmatpush1.bf16.msra.mxu0 0
        %1478 = vmatprep.subr.bf16.mxu0 0
        %1479 = vmatpush1.bf16.msra.mxu0 0
        %1480 = vmatprep.subr.bf16.mxu0 0
        %1481 = vmatpush1.bf16.msra.mxu0 0
        %1482 = vmatprep.subr.bf16.mxu0 0
        %1483 = vmatpush1.bf16.msra.mxu0 0
        %1484 = vmatprep.subr.bf16.mxu0 %v1342
        %1485 = vmatpush1.bf16.msra.mxu0 %v1339
        %1486 = vmatprep.subr.bf16.mxu0 0
        %1487 = vmatpush2.bf16.msra.mxu0 0
        %1488 = vmatprep.subr.bf16.mxu0 0
        %1489 = vmatpush2.bf16.msra.mxu0 0
        %1490 = vmatprep.subr.bf16.mxu0 0
        %1491 = vmatpush2.bf16.msra.mxu0 0
        %1492 = vmatprep.subr.bf16.mxu0 0
        %1493 = vmatpush2.bf16.msra.mxu0 0
        %1494 = vmatprep.subr.bf16.mxu0 0
        %1495 = vmatpush2.bf16.msra.mxu0 0
        %1496 = vmatprep.subr.bf16.mxu0 0
        %1497 = vmatpush2.bf16.msra.mxu0 0
        %1498 = vmatprep.subr.bf16.mxu0 0
        %1499 = vmatpush2.bf16.msra.mxu0 0
        %1500 = vmatprep.subr.bf16.mxu0 0
        %1501 = vmatpush2.bf16.msra.mxu0 0
        %1502 = vmatprep.mubr.bf16.mxu0 0
        %1503 = vmatmul.mubr.bf16.gmra.mxu0 %v1318
        %v1504 = vpop.f32.mrf.mxu0
        %v1505 = vadd.f32 0.0, %v1504
        %v1506 = vpop.f32.mrf.mxu0
        %v1507 = vadd.f32 0.0, %v1506
        %v1508 = vpop.f32.mrf.mxu0
        %v1509 = vpop.f32.mrf.mxu0
        %1510 = vdwg.mxu0
        %1511 = vmatprep.subr.bf16.mxu0 0
        %1512 = vmatpush1.bf16.msra.mxu0 0
        %1513 = vmatprep.subr.bf16.mxu0 0
        %1514 = vmatpush1.bf16.msra.mxu0 0
        %1515 = vmatprep.subr.bf16.mxu0 0
        %1516 = vmatpush1.bf16.msra.mxu0 0
        %1517 = vmatprep.subr.bf16.mxu0 0
        %1518 = vmatpush1.bf16.msra.mxu0 0
        %1519 = vmatprep.subr.bf16.mxu0 0
        %1520 = vmatpush1.bf16.msra.mxu0 0
        %1521 = vmatprep.subr.bf16.mxu0 0
        %1522 = vmatpush1.bf16.msra.mxu0 0
        %1523 = vmatprep.subr.bf16.mxu0 0
        %1524 = vmatpush1.bf16.msra.mxu0 0
        %1525 = vmatprep.subr.bf16.mxu0 0
        %1526 = vmatpush1.bf16.msra.mxu0 %v1345
        %1527 = vmatprep.subr.bf16.mxu0 0
        %1528 = vmatpush2.bf16.msra.mxu0 0
        %1529 = vmatprep.subr.bf16.mxu0 0
        %1530 = vmatpush2.bf16.msra.mxu0 0
        %1531 = vmatprep.subr.bf16.mxu0 0
        %1532 = vmatpush2.bf16.msra.mxu0 0
        %1533 = vmatprep.subr.bf16.mxu0 0
        %1534 = vmatpush2.bf16.msra.mxu0 0
        %1535 = vmatprep.subr.bf16.mxu0 0
        %1536 = vmatpush2.bf16.msra.mxu0 0
        %1537 = vmatprep.subr.bf16.mxu0 0
        %1538 = vmatpush2.bf16.msra.mxu0 0
        %1539 = vmatprep.subr.bf16.mxu0 0
        %1540 = vmatpush2.bf16.msra.mxu0 0
        %1541 = vmatprep.subr.bf16.mxu0 0
        %1542 = vmatpush2.bf16.msra.mxu0 0
        %1543 = vmatprep.mubr.bf16.mxu0 0
        %1544 = vmatmul.mubr.bf16.gmra.mxu0 %v1318
        %v1545 = vpop.f32.mrf.mxu0
        %v1546 = vadd.f32 0.0, %v1545
        %v1547 = vpop.f32.mrf.mxu0
        %v1548 = vpop.f32.mrf.mxu0
        %v1549 = vpop.f32.mrf.mxu0
        %1550 = vdwg.mxu0
        %v1551 = vadd.f32 %v1279, %v1382
        %v1552 = vadd.f32 %v1280, %v1384
        %v1553 = vadd.f32 %v1281, %v1423
        %v1554 = vadd.f32 %v1282, %v1425
        %v1555 = vadd.f32 %v1283, %v1464
        %v1556 = vadd.f32 %v1284, %v1466
        %v1557 = vadd.f32 %v1285, %v1505
        %v1558 = vadd.f32 %v1286, %v1507
        %v1559 = vadd.f32 %v1287, %v1546
        %s1560 = scalar_lea.vmem %s1, 20
        %v1561 = vld [vmem:[%s1560] sm:$0xf]
        %1562 = vrot.lane.b32.xlu0 %v213, 92
        %v1563 = vpop.permute.xlu0 %1562
        %1564 = vrot.lane.b32.xlu0 %v221, 92
        %v1565 = vpop.permute.xlu0 %1564
        %1566 = vrot.lane.b32.xlu0 %v220, 92
        %v1567 = vpop.permute.xlu0 %1566
        %1568 = vrot.lane.b32.xlu0 %v222, 92
        %v1569 = vpop.permute.xlu0 %1568
        %1570 = vrot.lane.b32.xlu0 %v230, 92
        %v1571 = vpop.permute.xlu0 %1570
        %1572 = vrot.lane.b32.xlu0 %v238, 92
        %v1573 = vpop.permute.xlu0 %1572
        %1574 = vrot.lane.b32.xlu0 %v237, 92
        %v1575 = vpop.permute.xlu0 %1574
        %1576 = vrot.lane.b32.xlu0 %v239, 92
        %v1577 = vpop.permute.xlu0 %1576
        %1578 = vrot.lane.b32.xlu0 %v246, 92
        %v1579 = vpop.permute.xlu0 %1578
        %vm1580 = vcmask 752640
        %v1581 = vsel %vm1580, %v1563, %v1565
        %v1582 = vsel %vm1580, %v1565, %v1567
        %v1583 = vsel %vm1580, %v1567, %v1569
        %v1584 = vsel %vm1580, %v1569, %v1571
        %v1585 = vsel %vm1580, %v1571, %v1573
        %v1586 = vsel %vm1580, %v1573, %v1575
        %v1587 = vsel %vm1580, %v1575, %v1577
        %v1588 = vsel %vm1580, %v1577, %v1579
        %v1590 = vsel %vm274, %v1561, 0
        %v1593 = vsel %vm278, %v1581, 0
        %v1596 = vsel %vm278, %v1582, 0
        %v1599 = vsel %vm278, %v1583, 0
        %v1602 = vsel %vm278, %v1584, 0
        %v1605 = vsel %vm278, %v1585, 0
        %v1608 = vsel %vm278, %v1586, 0
        %v1611 = vsel %vm278, %v1587, 0
        %v1614 = vsel %vm278, %v1588, 0
        %v1617 = vsel %vm278, %v1579, 0
        %1619 = vmatprep.subr.bf16.mxu0 0
        %1620 = vmatpush1.bf16.msra.mxu0 0
        %1621 = vmatprep.subr.bf16.mxu0 0
        %1622 = vmatpush1.bf16.msra.mxu0 0
        %1623 = vmatprep.subr.bf16.mxu0 0
        %1624 = vmatpush1.bf16.msra.mxu0 0
        %1625 = vmatprep.subr.bf16.mxu0 0
        %1626 = vmatpush1.bf16.msra.mxu0 0
        %1627 = vmatprep.subr.bf16.mxu0 0
        %1628 = vmatpush1.bf16.msra.mxu0 0
        %1629 = vmatprep.subr.bf16.mxu0 0
        %1630 = vmatpush1.bf16.msra.mxu0 0
        %1631 = vmatprep.subr.bf16.mxu0 0
        %1632 = vmatpush1.bf16.msra.mxu0 0
        %1633 = vmatprep.subr.bf16.mxu0 %v1596
        %1634 = vmatpush1.bf16.msra.mxu0 %v1593
        %1635 = vmatprep.subr.bf16.mxu0 0
        %1636 = vmatpush2.bf16.msra.mxu0 0
        %1637 = vmatprep.subr.bf16.mxu0 0
        %1638 = vmatpush2.bf16.msra.mxu0 0
        %1639 = vmatprep.subr.bf16.mxu0 0
        %1640 = vmatpush2.bf16.msra.mxu0 0
        %1641 = vmatprep.subr.bf16.mxu0 0
        %1642 = vmatpush2.bf16.msra.mxu0 0
        %1643 = vmatprep.subr.bf16.mxu0 0
        %1644 = vmatpush2.bf16.msra.mxu0 0
        %1645 = vmatprep.subr.bf16.mxu0 0
        %1646 = vmatpush2.bf16.msra.mxu0 0
        %1647 = vmatprep.subr.bf16.mxu0 0
        %1648 = vmatpush2.bf16.msra.mxu0 0
        %1649 = vmatprep.subr.bf16.mxu0 0
        %1650 = vmatpush2.bf16.msra.mxu0 0
        %1651 = vmatprep.mubr.bf16.mxu0 0
        %1652 = vmatmul.mubr.bf16.gmra.mxu0 %v1590
        %v1653 = vpop.f32.mrf.mxu0
        %v1654 = vadd.f32 0.0, %v1653
        %v1655 = vpop.f32.mrf.mxu0
        %v1656 = vadd.f32 0.0, %v1655
        %v1657 = vpop.f32.mrf.mxu0
        %v1658 = vpop.f32.mrf.mxu0
        %1659 = vdwg.mxu0
        %1660 = vmatprep.subr.bf16.mxu0 0
        %1661 = vmatpush1.bf16.msra.mxu0 0
        %1662 = vmatprep.subr.bf16.mxu0 0
        %1663 = vmatpush1.bf16.msra.mxu0 0
        %1664 = vmatprep.subr.bf16.mxu0 0
        %1665 = vmatpush1.bf16.msra.mxu0 0
        %1666 = vmatprep.subr.bf16.mxu0 0
        %1667 = vmatpush1.bf16.msra.mxu0 0
        %1668 = vmatprep.subr.bf16.mxu0 0
        %1669 = vmatpush1.bf16.msra.mxu0 0
        %1670 = vmatprep.subr.bf16.mxu0 0
        %1671 = vmatpush1.bf16.msra.mxu0 0
        %1672 = vmatprep.subr.bf16.mxu0 0
        %1673 = vmatpush1.bf16.msra.mxu0 0
        %1674 = vmatprep.subr.bf16.mxu0 %v1602
        %1675 = vmatpush1.bf16.msra.mxu0 %v1599
        %1676 = vmatprep.subr.bf16.mxu0 0
        %1677 = vmatpush2.bf16.msra.mxu0 0
        %1678 = vmatprep.subr.bf16.mxu0 0
        %1679 = vmatpush2.bf16.msra.mxu0 0
        %1680 = vmatprep.subr.bf16.mxu0 0
        %1681 = vmatpush2.bf16.msra.mxu0 0
        %1682 = vmatprep.subr.bf16.mxu0 0
        %1683 = vmatpush2.bf16.msra.mxu0 0
        %1684 = vmatprep.subr.bf16.mxu0 0
        %1685 = vmatpush2.bf16.msra.mxu0 0
        %1686 = vmatprep.subr.bf16.mxu0 0
        %1687 = vmatpush2.bf16.msra.mxu0 0
        %1688 = vmatprep.subr.bf16.mxu0 0
        %1689 = vmatpush2.bf16.msra.mxu0 0
        %1690 = vmatprep.subr.bf16.mxu0 0
        %1691 = vmatpush2.bf16.msra.mxu0 0
        %1692 = vmatprep.mubr.bf16.mxu0 0
        %1693 = vmatmul.mubr.bf16.gmra.mxu0 %v1590
        %v1694 = vpop.f32.mrf.mxu0
        %v1695 = vadd.f32 0.0, %v1694
        %v1696 = vpop.f32.mrf.mxu0
        %v1697 = vadd.f32 0.0, %v1696
        %v1698 = vpop.f32.mrf.mxu0
        %v1699 = vpop.f32.mrf.mxu0
        %1700 = vdwg.mxu0
        %1701 = vmatprep.subr.bf16.mxu0 0
        %1702 = vmatpush1.bf16.msra.mxu0 0
        %1703 = vmatprep.subr.bf16.mxu0 0
        %1704 = vmatpush1.bf16.msra.mxu0 0
        %1705 = vmatprep.subr.bf16.mxu0 0
        %1706 = vmatpush1.bf16.msra.mxu0 0
        %1707 = vmatprep.subr.bf16.mxu0 0
        %1708 = vmatpush1.bf16.msra.mxu0 0
        %1709 = vmatprep.subr.bf16.mxu0 0
        %1710 = vmatpush1.bf16.msra.mxu0 0
        %1711 = vmatprep.subr.bf16.mxu0 0
        %1712 = vmatpush1.bf16.msra.mxu0 0
        %1713 = vmatprep.subr.bf16.mxu0 0
        %1714 = vmatpush1.bf16.msra.mxu0 0
        %1715 = vmatprep.subr.bf16.mxu0 %v1608
        %1716 = vmatpush1.bf16.msra.mxu0 %v1605
        %1717 = vmatprep.subr.bf16.mxu0 0
        %1718 = vmatpush2.bf16.msra.mxu0 0
        %1719 = vmatprep.subr.bf16.mxu0 0
        %1720 = vmatpush2.bf16.msra.mxu0 0
        %1721 = vmatprep.subr.bf16.mxu0 0
        %1722 = vmatpush2.bf16.msra.mxu0 0
        %1723 = vmatprep.subr.bf16.mxu0 0
        %1724 = vmatpush2.bf16.msra.mxu0 0
        %1725 = vmatprep.subr.bf16.mxu0 0
        %1726 = vmatpush2.bf16.msra.mxu0 0
        %1727 = vmatprep.subr.bf16.mxu0 0
        %1728 = vmatpush2.bf16.msra.mxu0 0
        %1729 = vmatprep.subr.bf16.mxu0 0
        %1730 = vmatpush2.bf16.msra.mxu0 0
        %1731 = vmatprep.subr.bf16.mxu0 0
        %1732 = vmatpush2.bf16.msra.mxu0 0
        %1733 = vmatprep.mubr.bf16.mxu0 0
        %1734 = vmatmul.mubr.bf16.gmra.mxu0 %v1590
        %v1735 = vpop.f32.mrf.mxu0
        %v1736 = vadd.f32 0.0, %v1735
        %v1737 = vpop.f32.mrf.mxu0
        %v1738 = vadd.f32 0.0, %v1737
        %v1739 = vpop.f32.mrf.mxu0
        %v1740 = vpop.f32.mrf.mxu0
        %1741 = vdwg.mxu0
        %1742 = vmatprep.subr.bf16.mxu0 0
        %1743 = vmatpush1.bf16.msra.mxu0 0
        %1744 = vmatprep.subr.bf16.mxu0 0
        %1745 = vmatpush1.bf16.msra.mxu0 0
        %1746 = vmatprep.subr.bf16.mxu0 0
        %1747 = vmatpush1.bf16.msra.mxu0 0
        %1748 = vmatprep.subr.bf16.mxu0 0
        %1749 = vmatpush1.bf16.msra.mxu0 0
        %1750 = vmatprep.subr.bf16.mxu0 0
        %1751 = vmatpush1.bf16.msra.mxu0 0
        %1752 = vmatprep.subr.bf16.mxu0 0
        %1753 = vmatpush1.bf16.msra.mxu0 0
        %1754 = vmatprep.subr.bf16.mxu0 0
        %1755 = vmatpush1.bf16.msra.mxu0 0
        %1756 = vmatprep.subr.bf16.mxu0 %v1614
        %1757 = vmatpush1.bf16.msra.mxu0 %v1611
        %1758 = vmatprep.subr.bf16.mxu0 0
        %1759 = vmatpush2.bf16.msra.mxu0 0
        %1760 = vmatprep.subr.bf16.mxu0 0
        %1761 = vmatpush2.bf16.msra.mxu0 0
        %1762 = vmatprep.subr.bf16.mxu0 0
        %1763 = vmatpush2.bf16.msra.mxu0 0
        %1764 = vmatprep.subr.bf16.mxu0 0
        %1765 = vmatpush2.bf16.msra.mxu0 0
        %1766 = vmatprep.subr.bf16.mxu0 0
        %1767 = vmatpush2.bf16.msra.mxu0 0
        %1768 = vmatprep.subr.bf16.mxu0 0
        %1769 = vmatpush2.bf16.msra.mxu0 0
        %1770 = vmatprep.subr.bf16.mxu0 0
        %1771 = vmatpush2.bf16.msra.mxu0 0
        %1772 = vmatprep.subr.bf16.mxu0 0
        %1773 = vmatpush2.bf16.msra.mxu0 0
        %1774 = vmatprep.mubr.bf16.mxu0 0
        %1775 = vmatmul.mubr.bf16.gmra.mxu0 %v1590
        %v1776 = vpop.f32.mrf.mxu0
        %v1777 = vadd.f32 0.0, %v1776
        %v1778 = vpop.f32.mrf.mxu0
        %v1779 = vadd.f32 0.0, %v1778
        %v1780 = vpop.f32.mrf.mxu0
        %v1781 = vpop.f32.mrf.mxu0
        %1782 = vdwg.mxu0
        %1783 = vmatprep.subr.bf16.mxu0 0
        %1784 = vmatpush1.bf16.msra.mxu0 0
        %1785 = vmatprep.subr.bf16.mxu0 0
        %1786 = vmatpush1.bf16.msra.mxu0 0
        %1787 = vmatprep.subr.bf16.mxu0 0
        %1788 = vmatpush1.bf16.msra.mxu0 0
        %1789 = vmatprep.subr.bf16.mxu0 0
        %1790 = vmatpush1.bf16.msra.mxu0 0
        %1791 = vmatprep.subr.bf16.mxu0 0
        %1792 = vmatpush1.bf16.msra.mxu0 0
        %1793 = vmatprep.subr.bf16.mxu0 0
        %1794 = vmatpush1.bf16.msra.mxu0 0
        %1795 = vmatprep.subr.bf16.mxu0 0
        %1796 = vmatpush1.bf16.msra.mxu0 0
        %1797 = vmatprep.subr.bf16.mxu0 0
        %1798 = vmatpush1.bf16.msra.mxu0 %v1617
        %1799 = vmatprep.subr.bf16.mxu0 0
        %1800 = vmatpush2.bf16.msra.mxu0 0
        %1801 = vmatprep.subr.bf16.mxu0 0
        %1802 = vmatpush2.bf16.msra.mxu0 0
        %1803 = vmatprep.subr.bf16.mxu0 0
        %1804 = vmatpush2.bf16.msra.mxu0 0
        %1805 = vmatprep.subr.bf16.mxu0 0
        %1806 = vmatpush2.bf16.msra.mxu0 0
        %1807 = vmatprep.subr.bf16.mxu0 0
        %1808 = vmatpush2.bf16.msra.mxu0 0
        %1809 = vmatprep.subr.bf16.mxu0 0
        %1810 = vmatpush2.bf16.msra.mxu0 0
        %1811 = vmatprep.subr.bf16.mxu0 0
        %1812 = vmatpush2.bf16.msra.mxu0 0
        %1813 = vmatprep.subr.bf16.mxu0 0
        %1814 = vmatpush2.bf16.msra.mxu0 0
        %1815 = vmatprep.mubr.bf16.mxu0 0
        %1816 = vmatmul.mubr.bf16.gmra.mxu0 %v1590
        %v1817 = vpop.f32.mrf.mxu0
        %v1818 = vadd.f32 0.0, %v1817
        %v1819 = vpop.f32.mrf.mxu0
        %v1820 = vpop.f32.mrf.mxu0
        %v1821 = vpop.f32.mrf.mxu0
        %1822 = vdwg.mxu0
        %v1823 = vadd.f32 %v1551, %v1654
        %v1824 = vadd.f32 %v1552, %v1656
        %v1825 = vadd.f32 %v1553, %v1695
        %v1826 = vadd.f32 %v1554, %v1697
        %v1827 = vadd.f32 %v1555, %v1736
        %v1828 = vadd.f32 %v1556, %v1738
        %v1829 = vadd.f32 %v1557, %v1777
        %v1830 = vadd.f32 %v1558, %v1779
        %v1831 = vadd.f32 %v1559, %v1818
        %s1832 = scalar_lea.vmem %s1, 24
        %v1833 = vld [vmem:[%s1832] sm:$0xf]
        %v1834 = vcombine.high %v246, %v246
        %1835 = vrot.lane.b32.xlu0 %v213, 60
        %v1836 = vpop.permute.xlu0 %1835
        %1837 = vrot.lane.b32.xlu0 %v221, 60
        %v1838 = vpop.permute.xlu0 %1837
        %1839 = vrot.lane.b32.xlu0 %v220, 60
        %v1840 = vpop.permute.xlu0 %1839
        %1841 = vrot.lane.b32.xlu0 %v222, 60
        %v1842 = vpop.permute.xlu0 %1841
        %1843 = vrot.lane.b32.xlu0 %v230, 60
        %v1844 = vpop.permute.xlu0 %1843
        %1845 = vrot.lane.b32.xlu0 %v238, 60
        %v1846 = vpop.permute.xlu0 %1845
        %1847 = vrot.lane.b32.xlu0 %v237, 60
        %v1848 = vpop.permute.xlu0 %1847
        %1849 = vrot.lane.b32.xlu0 %v239, 60
        %v1850 = vpop.permute.xlu0 %1849
        %1851 = vrot.lane.b32.xlu0 %v246, 60
        %v1852 = vpop.permute.xlu0 %1851
        %1853 = vrot.lane.b32.xlu0 %v1834, 60
        %v1854 = vpop.permute.xlu0 %1853
        %vm1855 = vcmask 490496
        %v1856 = vsel %vm1855, %v1836, %v1838
        %v1857 = vsel %vm1855, %v1838, %v1840
        %v1858 = vsel %vm1855, %v1840, %v1842
        %v1859 = vsel %vm1855, %v1842, %v1844
        %v1860 = vsel %vm1855, %v1844, %v1846
        %v1861 = vsel %vm1855, %v1846, %v1848
        %v1862 = vsel %vm1855, %v1848, %v1850
        %v1863 = vsel %vm1855, %v1850, %v1852
        %v1864 = vsel %vm1855, %v1852, %v1854
        %v1866 = vsel %vm274, %v1833, 0
        %v1869 = vsel %vm278, %v1856, 0
        %v1872 = vsel %vm278, %v1857, 0
        %v1875 = vsel %vm278, %v1858, 0
        %v1878 = vsel %vm278, %v1859, 0
        %v1881 = vsel %vm278, %v1860, 0
        %v1884 = vsel %vm278, %v1861, 0
        %v1887 = vsel %vm278, %v1862, 0
        %v1890 = vsel %vm278, %v1863, 0
        %v1893 = vsel %vm278, %v1864, 0
        %1895 = vmatprep.subr.bf16.mxu0 0
        %1896 = vmatpush1.bf16.msra.mxu0 0
        %1897 = vmatprep.subr.bf16.mxu0 0
        %1898 = vmatpush1.bf16.msra.mxu0 0
        %1899 = vmatprep.subr.bf16.mxu0 0
        %1900 = vmatpush1.bf16.msra.mxu0 0
        %1901 = vmatprep.subr.bf16.mxu0 0
        %1902 = vmatpush1.bf16.msra.mxu0 0
        %1903 = vmatprep.subr.bf16.mxu0 0
        %1904 = vmatpush1.bf16.msra.mxu0 0
        %1905 = vmatprep.subr.bf16.mxu0 0
        %1906 = vmatpush1.bf16.msra.mxu0 0
        %1907 = vmatprep.subr.bf16.mxu0 0
        %1908 = vmatpush1.bf16.msra.mxu0 0
        %1909 = vmatprep.subr.bf16.mxu0 %v1872
        %1910 = vmatpush1.bf16.msra.mxu0 %v1869
        %1911 = vmatprep.subr.bf16.mxu0 0
        %1912 = vmatpush2.bf16.msra.mxu0 0
        %1913 = vmatprep.subr.bf16.mxu0 0
        %1914 = vmatpush2.bf16.msra.mxu0 0
        %1915 = vmatprep.subr.bf16.mxu0 0
        %1916 = vmatpush2.bf16.msra.mxu0 0
        %1917 = vmatprep.subr.bf16.mxu0 0
        %1918 = vmatpush2.bf16.msra.mxu0 0
        %1919 = vmatprep.subr.bf16.mxu0 0
        %1920 = vmatpush2.bf16.msra.mxu0 0
        %1921 = vmatprep.subr.bf16.mxu0 0
        %1922 = vmatpush2.bf16.msra.mxu0 0
        %1923 = vmatprep.subr.bf16.mxu0 0
        %1924 = vmatpush2.bf16.msra.mxu0 0
        %1925 = vmatprep.subr.bf16.mxu0 0
        %1926 = vmatpush2.bf16.msra.mxu0 0
        %1927 = vmatprep.mubr.bf16.mxu0 0
        %1928 = vmatmul.mubr.bf16.gmra.mxu0 %v1866
        %v1929 = vpop.f32.mrf.mxu0
        %v1930 = vadd.f32 0.0, %v1929
        %v1931 = vpop.f32.mrf.mxu0
        %v1932 = vadd.f32 0.0, %v1931
        %v1933 = vpop.f32.mrf.mxu0
        %v1934 = vpop.f32.mrf.mxu0
        %1935 = vdwg.mxu0
        %1936 = vmatprep.subr.bf16.mxu0 0
        %1937 = vmatpush1.bf16.msra.mxu0 0
        %1938 = vmatprep.subr.bf16.mxu0 0
        %1939 = vmatpush1.bf16.msra.mxu0 0
        %1940 = vmatprep.subr.bf16.mxu0 0
        %1941 = vmatpush1.bf16.msra.mxu0 0
        %1942 = vmatprep.subr.bf16.mxu0 0
        %1943 = vmatpush1.bf16.msra.mxu0 0
        %1944 = vmatprep.subr.bf16.mxu0 0
        %1945 = vmatpush1.bf16.msra.mxu0 0
        %1946 = vmatprep.subr.bf16.mxu0 0
        %1947 = vmatpush1.bf16.msra.mxu0 0
        %1948 = vmatprep.subr.bf16.mxu0 0
        %1949 = vmatpush1.bf16.msra.mxu0 0
        %1950 = vmatprep.subr.bf16.mxu0 %v1878
        %1951 = vmatpush1.bf16.msra.mxu0 %v1875
        %1952 = vmatprep.subr.bf16.mxu0 0
        %1953 = vmatpush2.bf16.msra.mxu0 0
        %1954 = vmatprep.subr.bf16.mxu0 0
        %1955 = vmatpush2.bf16.msra.mxu0 0
        %1956 = vmatprep.subr.bf16.mxu0 0
        %1957 = vmatpush2.bf16.msra.mxu0 0
        %1958 = vmatprep.subr.bf16.mxu0 0
        %1959 = vmatpush2.bf16.msra.mxu0 0
        %1960 = vmatprep.subr.bf16.mxu0 0
        %1961 = vmatpush2.bf16.msra.mxu0 0
        %1962 = vmatprep.subr.bf16.mxu0 0
        %1963 = vmatpush2.bf16.msra.mxu0 0
        %1964 = vmatprep.subr.bf16.mxu0 0
        %1965 = vmatpush2.bf16.msra.mxu0 0
        %1966 = vmatprep.subr.bf16.mxu0 0
        %1967 = vmatpush2.bf16.msra.mxu0 0
        %1968 = vmatprep.mubr.bf16.mxu0 0
        %1969 = vmatmul.mubr.bf16.gmra.mxu0 %v1866
        %v1970 = vpop.f32.mrf.mxu0
        %v1971 = vadd.f32 0.0, %v1970
        %v1972 = vpop.f32.mrf.mxu0
        %v1973 = vadd.f32 0.0, %v1972
        %v1974 = vpop.f32.mrf.mxu0
        %v1975 = vpop.f32.mrf.mxu0
        %1976 = vdwg.mxu0
        %1977 = vmatprep.subr.bf16.mxu0 0
        %1978 = vmatpush1.bf16.msra.mxu0 0
        %1979 = vmatprep.subr.bf16.mxu0 0
        %1980 = vmatpush1.bf16.msra.mxu0 0
        %1981 = vmatprep.subr.bf16.mxu0 0
        %1982 = vmatpush1.bf16.msra.mxu0 0
        %1983 = vmatprep.subr.bf16.mxu0 0
        %1984 = vmatpush1.bf16.msra.mxu0 0
        %1985 = vmatprep.subr.bf16.mxu0 0
        %1986 = vmatpush1.bf16.msra.mxu0 0
        %1987 = vmatprep.subr.bf16.mxu0 0
        %1988 = vmatpush1.bf16.msra.mxu0 0
        %1989 = vmatprep.subr.bf16.mxu0 0
        %1990 = vmatpush1.bf16.msra.mxu0 0
        %1991 = vmatprep.subr.bf16.mxu0 %v1884
        %1992 = vmatpush1.bf16.msra.mxu0 %v1881
        %1993 = vmatprep.subr.bf16.mxu0 0
        %1994 = vmatpush2.bf16.msra.mxu0 0
        %1995 = vmatprep.subr.bf16.mxu0 0
        %1996 = vmatpush2.bf16.msra.mxu0 0
        %1997 = vmatprep.subr.bf16.mxu0 0
        %1998 = vmatpush2.bf16.msra.mxu0 0
        %1999 = vmatprep.subr.bf16.mxu0 0
        %2000 = vmatpush2.bf16.msra.mxu0 0
        %2001 = vmatprep.subr.bf16.mxu0 0
        %2002 = vmatpush2.bf16.msra.mxu0 0
        %2003 = vmatprep.subr.bf16.mxu0 0
        %2004 = vmatpush2.bf16.msra.mxu0 0
        %2005 = vmatprep.subr.bf16.mxu0 0
        %2006 = vmatpush2.bf16.msra.mxu0 0
        %2007 = vmatprep.subr.bf16.mxu0 0
        %2008 = vmatpush2.bf16.msra.mxu0 0
        %2009 = vmatprep.mubr.bf16.mxu0 0
        %2010 = vmatmul.mubr.bf16.gmra.mxu0 %v1866
        %v2011 = vpop.f32.mrf.mxu0
        %v2012 = vadd.f32 0.0, %v2011
        %v2013 = vpop.f32.mrf.mxu0
        %v2014 = vadd.f32 0.0, %v2013
        %v2015 = vpop.f32.mrf.mxu0
        %v2016 = vpop.f32.mrf.mxu0
        %2017 = vdwg.mxu0
        %2018 = vmatprep.subr.bf16.mxu0 0
        %2019 = vmatpush1.bf16.msra.mxu0 0
        %2020 = vmatprep.subr.bf16.mxu0 0
        %2021 = vmatpush1.bf16.msra.mxu0 0
        %2022 = vmatprep.subr.bf16.mxu0 0
        %2023 = vmatpush1.bf16.msra.mxu0 0
        %2024 = vmatprep.subr.bf16.mxu0 0
        %2025 = vmatpush1.bf16.msra.mxu0 0
        %2026 = vmatprep.subr.bf16.mxu0 0
        %2027 = vmatpush1.bf16.msra.mxu0 0
        %2028 = vmatprep.subr.bf16.mxu0 0
        %2029 = vmatpush1.bf16.msra.mxu0 0
        %2030 = vmatprep.subr.bf16.mxu0 0
        %2031 = vmatpush1.bf16.msra.mxu0 0
        %2032 = vmatprep.subr.bf16.mxu0 %v1890
        %2033 = vmatpush1.bf16.msra.mxu0 %v1887
        %2034 = vmatprep.subr.bf16.mxu0 0
        %2035 = vmatpush2.bf16.msra.mxu0 0
        %2036 = vmatprep.subr.bf16.mxu0 0
        %2037 = vmatpush2.bf16.msra.mxu0 0
        %2038 = vmatprep.subr.bf16.mxu0 0
        %2039 = vmatpush2.bf16.msra.mxu0 0
        %2040 = vmatprep.subr.bf16.mxu0 0
        %2041 = vmatpush2.bf16.msra.mxu0 0
        %2042 = vmatprep.subr.bf16.mxu0 0
        %2043 = vmatpush2.bf16.msra.mxu0 0
        %2044 = vmatprep.subr.bf16.mxu0 0
        %2045 = vmatpush2.bf16.msra.mxu0 0
        %2046 = vmatprep.subr.bf16.mxu0 0
        %2047 = vmatpush2.bf16.msra.mxu0 0
        %2048 = vmatprep.subr.bf16.mxu0 0
        %2049 = vmatpush2.bf16.msra.mxu0 0
        %2050 = vmatprep.mubr.bf16.mxu0 0
        %2051 = vmatmul.mubr.bf16.gmra.mxu0 %v1866
        %v2052 = vpop.f32.mrf.mxu0
        %v2053 = vadd.f32 0.0, %v2052
        %v2054 = vpop.f32.mrf.mxu0
        %v2055 = vadd.f32 0.0, %v2054
        %v2056 = vpop.f32.mrf.mxu0
        %v2057 = vpop.f32.mrf.mxu0
        %2058 = vdwg.mxu0
        %2059 = vmatprep.subr.bf16.mxu0 0
        %2060 = vmatpush1.bf16.msra.mxu0 0
        %2061 = vmatprep.subr.bf16.mxu0 0
        %2062 = vmatpush1.bf16.msra.mxu0 0
        %2063 = vmatprep.subr.bf16.mxu0 0
        %2064 = vmatpush1.bf16.msra.mxu0 0
        %2065 = vmatprep.subr.bf16.mxu0 0
        %2066 = vmatpush1.bf16.msra.mxu0 0
        %2067 = vmatprep.subr.bf16.mxu0 0
        %2068 = vmatpush1.bf16.msra.mxu0 0
        %2069 = vmatprep.subr.bf16.mxu0 0
        %2070 = vmatpush1.bf16.msra.mxu0 0
        %2071 = vmatprep.subr.bf16.mxu0 0
        %2072 = vmatpush1.bf16.msra.mxu0 0
        %2073 = vmatprep.subr.bf16.mxu0 0
        %2074 = vmatpush1.bf16.msra.mxu0 %v1893
        %2075 = vmatprep.subr.bf16.mxu0 0
        %2076 = vmatpush2.bf16.msra.mxu0 0
        %2077 = vmatprep.subr.bf16.mxu0 0
        %2078 = vmatpush2.bf16.msra.mxu0 0
        %2079 = vmatprep.subr.bf16.mxu0 0
        %2080 = vmatpush2.bf16.msra.mxu0 0
        %2081 = vmatprep.subr.bf16.mxu0 0
        %2082 = vmatpush2.bf16.msra.mxu0 0
        %2083 = vmatprep.subr.bf16.mxu0 0
        %2084 = vmatpush2.bf16.msra.mxu0 0
        %2085 = vmatprep.subr.bf16.mxu0 0
        %2086 = vmatpush2.bf16.msra.mxu0 0
        %2087 = vmatprep.subr.bf16.mxu0 0
        %2088 = vmatpush2.bf16.msra.mxu0 0
        %2089 = vmatprep.subr.bf16.mxu0 0
        %2090 = vmatpush2.bf16.msra.mxu0 0
        %2091 = vmatprep.mubr.bf16.mxu0 0
        %2092 = vmatmul.mubr.bf16.gmra.mxu0 %v1866
        %v2093 = vpop.f32.mrf.mxu0
        %v2094 = vadd.f32 0.0, %v2093
        %v2095 = vpop.f32.mrf.mxu0
        %v2096 = vpop.f32.mrf.mxu0
        %v2097 = vpop.f32.mrf.mxu0
        %2098 = vdwg.mxu0
        %v2099 = vadd.f32 %v1823, %v1930
        %v2100 = vadd.f32 %v1824, %v1932
        %v2101 = vadd.f32 %v1825, %v1971
        %v2102 = vadd.f32 %v1826, %v1973
        %v2103 = vadd.f32 %v1827, %v2012
        %v2104 = vadd.f32 %v1828, %v2014
        %v2105 = vadd.f32 %v1829, %v2053
        %v2106 = vadd.f32 %v1830, %v2055
        %v2107 = vadd.f32 %v1831, %v2094
        %s2108 = scalar_lea.vmem %s1, 28
        %v2109 = vld [vmem:[%s2108] sm:$0xf]
        %2110 = vrot.lane.b32.xlu0 %v213, 59
        %v2111 = vpop.permute.xlu0 %2110
        %2112 = vrot.lane.b32.xlu0 %v221, 59
        %v2113 = vpop.permute.xlu0 %2112
        %2114 = vrot.lane.b32.xlu0 %v220, 59
        %v2115 = vpop.permute.xlu0 %2114
        %2116 = vrot.lane.b32.xlu0 %v222, 59
        %v2117 = vpop.permute.xlu0 %2116
        %2118 = vrot.lane.b32.xlu0 %v230, 59
        %v2119 = vpop.permute.xlu0 %2118
        %2120 = vrot.lane.b32.xlu0 %v238, 59
        %v2121 = vpop.permute.xlu0 %2120
        %2122 = vrot.lane.b32.xlu0 %v237, 59
        %v2123 = vpop.permute.xlu0 %2122
        %2124 = vrot.lane.b32.xlu0 %v239, 59
        %v2125 = vpop.permute.xlu0 %2124
        %2126 = vrot.lane.b32.xlu0 %v246, 59
        %v2127 = vpop.permute.xlu0 %2126
        %2128 = vrot.lane.b32.xlu0 %v1834, 59
        %v2129 = vpop.permute.xlu0 %2128
        %vm2130 = vcmask 482304
        %v2131 = vsel %vm2130, %v2111, %v2113
        %v2132 = vsel %vm2130, %v2113, %v2115
        %v2133 = vsel %vm2130, %v2115, %v2117
        %v2134 = vsel %vm2130, %v2117, %v2119
        %v2135 = vsel %vm2130, %v2119, %v2121
        %v2136 = vsel %vm2130, %v2121, %v2123
        %v2137 = vsel %vm2130, %v2123, %v2125
        %v2138 = vsel %vm2130, %v2125, %v2127
        %v2139 = vsel %vm2130, %v2127, %v2129
        %v2141 = vsel %vm274, %v2109, 0
        %v2144 = vsel %vm278, %v2131, 0
        %v2147 = vsel %vm278, %v2132, 0
        %v2150 = vsel %vm278, %v2133, 0
        %v2153 = vsel %vm278, %v2134, 0
        %v2156 = vsel %vm278, %v2135, 0
        %v2159 = vsel %vm278, %v2136, 0
        %v2162 = vsel %vm278, %v2137, 0
        %v2165 = vsel %vm278, %v2138, 0
        %v2168 = vsel %vm278, %v2139, 0
        %2170 = vmatprep.subr.bf16.mxu0 0
        %2171 = vmatpush1.bf16.msra.mxu0 0
        %2172 = vmatprep.subr.bf16.mxu0 0
        %2173 = vmatpush1.bf16.msra.mxu0 0
        %2174 = vmatprep.subr.bf16.mxu0 0
        %2175 = vmatpush1.bf16.msra.mxu0 0
        %2176 = vmatprep.subr.bf16.mxu0 0
        %2177 = vmatpush1.bf16.msra.mxu0 0
        %2178 = vmatprep.subr.bf16.mxu0 0
        %2179 = vmatpush1.bf16.msra.mxu0 0
        %2180 = vmatprep.subr.bf16.mxu0 0
        %2181 = vmatpush1.bf16.msra.mxu0 0
        %2182 = vmatprep.subr.bf16.mxu0 0
        %2183 = vmatpush1.bf16.msra.mxu0 0
        %2184 = vmatprep.subr.bf16.mxu0 %v2147
        %2185 = vmatpush1.bf16.msra.mxu0 %v2144
        %2186 = vmatprep.subr.bf16.mxu0 0
        %2187 = vmatpush2.bf16.msra.mxu0 0
        %2188 = vmatprep.subr.bf16.mxu0 0
        %2189 = vmatpush2.bf16.msra.mxu0 0
        %2190 = vmatprep.subr.bf16.mxu0 0
        %2191 = vmatpush2.bf16.msra.mxu0 0
        %2192 = vmatprep.subr.bf16.mxu0 0
        %2193 = vmatpush2.bf16.msra.mxu0 0
        %2194 = vmatprep.subr.bf16.mxu0 0
        %2195 = vmatpush2.bf16.msra.mxu0 0
        %2196 = vmatprep.subr.bf16.mxu0 0
        %2197 = vmatpush2.bf16.msra.mxu0 0
        %2198 = vmatprep.subr.bf16.mxu0 0
        %2199 = vmatpush2.bf16.msra.mxu0 0
        %2200 = vmatprep.subr.bf16.mxu0 0
        %2201 = vmatpush2.bf16.msra.mxu0 0
        %2202 = vmatprep.mubr.bf16.mxu0 0
        %2203 = vmatmul.mubr.bf16.gmra.mxu0 %v2141
        %v2204 = vpop.f32.mrf.mxu0
        %v2205 = vadd.f32 0.0, %v2204
        %v2206 = vpop.f32.mrf.mxu0
        %v2207 = vadd.f32 0.0, %v2206
        %v2208 = vpop.f32.mrf.mxu0
        %v2209 = vpop.f32.mrf.mxu0
        %2210 = vdwg.mxu0
        %2211 = vmatprep.subr.bf16.mxu0 0
        %2212 = vmatpush1.bf16.msra.mxu0 0
        %2213 = vmatprep.subr.bf16.mxu0 0
        %2214 = vmatpush1.bf16.msra.mxu0 0
        %2215 = vmatprep.subr.bf16.mxu0 0
        %2216 = vmatpush1.bf16.msra.mxu0 0
        %2217 = vmatprep.subr.bf16.mxu0 0
        %2218 = vmatpush1.bf16.msra.mxu0 0
        %2219 = vmatprep.subr.bf16.mxu0 0
        %2220 = vmatpush1.bf16.msra.mxu0 0
        %2221 = vmatprep.subr.bf16.mxu0 0
        %2222 = vmatpush1.bf16.msra.mxu0 0
        %2223 = vmatprep.subr.bf16.mxu0 0
        %2224 = vmatpush1.bf16.msra.mxu0 0
        %2225 = vmatprep.subr.bf16.mxu0 %v2153
        %2226 = vmatpush1.bf16.msra.mxu0 %v2150
        %2227 = vmatprep.subr.bf16.mxu0 0
        %2228 = vmatpush2.bf16.msra.mxu0 0
        %2229 = vmatprep.subr.bf16.mxu0 0
        %2230 = vmatpush2.bf16.msra.mxu0 0
        %2231 = vmatprep.subr.bf16.mxu0 0
        %2232 = vmatpush2.bf16.msra.mxu0 0
        %2233 = vmatprep.subr.bf16.mxu0 0
        %2234 = vmatpush2.bf16.msra.mxu0 0
        %2235 = vmatprep.subr.bf16.mxu0 0
        %2236 = vmatpush2.bf16.msra.mxu0 0
        %2237 = vmatprep.subr.bf16.mxu0 0
        %2238 = vmatpush2.bf16.msra.mxu0 0
        %2239 = vmatprep.subr.bf16.mxu0 0
        %2240 = vmatpush2.bf16.msra.mxu0 0
        %2241 = vmatprep.subr.bf16.mxu0 0
        %2242 = vmatpush2.bf16.msra.mxu0 0
        %2243 = vmatprep.mubr.bf16.mxu0 0
        %2244 = vmatmul.mubr.bf16.gmra.mxu0 %v2141
        %v2245 = vpop.f32.mrf.mxu0
        %v2246 = vadd.f32 0.0, %v2245
        %v2247 = vpop.f32.mrf.mxu0
        %v2248 = vadd.f32 0.0, %v2247
        %v2249 = vpop.f32.mrf.mxu0
        %v2250 = vpop.f32.mrf.mxu0
        %2251 = vdwg.mxu0
        %2252 = vmatprep.subr.bf16.mxu0 0
        %2253 = vmatpush1.bf16.msra.mxu0 0
        %2254 = vmatprep.subr.bf16.mxu0 0
        %2255 = vmatpush1.bf16.msra.mxu0 0
        %2256 = vmatprep.subr.bf16.mxu0 0
        %2257 = vmatpush1.bf16.msra.mxu0 0
        %2258 = vmatprep.subr.bf16.mxu0 0
        %2259 = vmatpush1.bf16.msra.mxu0 0
        %2260 = vmatprep.subr.bf16.mxu0 0
        %2261 = vmatpush1.bf16.msra.mxu0 0
        %2262 = vmatprep.subr.bf16.mxu0 0
        %2263 = vmatpush1.bf16.msra.mxu0 0
        %2264 = vmatprep.subr.bf16.mxu0 0
        %2265 = vmatpush1.bf16.msra.mxu0 0
        %2266 = vmatprep.subr.bf16.mxu0 %v2159
        %2267 = vmatpush1.bf16.msra.mxu0 %v2156
        %2268 = vmatprep.subr.bf16.mxu0 0
        %2269 = vmatpush2.bf16.msra.mxu0 0
        %2270 = vmatprep.subr.bf16.mxu0 0
        %2271 = vmatpush2.bf16.msra.mxu0 0
        %2272 = vmatprep.subr.bf16.mxu0 0
        %2273 = vmatpush2.bf16.msra.mxu0 0
        %2274 = vmatprep.subr.bf16.mxu0 0
        %2275 = vmatpush2.bf16.msra.mxu0 0
        %2276 = vmatprep.subr.bf16.mxu0 0
        %2277 = vmatpush2.bf16.msra.mxu0 0
        %2278 = vmatprep.subr.bf16.mxu0 0
        %2279 = vmatpush2.bf16.msra.mxu0 0
        %2280 = vmatprep.subr.bf16.mxu0 0
        %2281 = vmatpush2.bf16.msra.mxu0 0
        %2282 = vmatprep.subr.bf16.mxu0 0
        %2283 = vmatpush2.bf16.msra.mxu0 0
        %2284 = vmatprep.mubr.bf16.mxu0 0
        %2285 = vmatmul.mubr.bf16.gmra.mxu0 %v2141
        %v2286 = vpop.f32.mrf.mxu0
        %v2287 = vadd.f32 0.0, %v2286
        %v2288 = vpop.f32.mrf.mxu0
        %v2289 = vadd.f32 0.0, %v2288
        %v2290 = vpop.f32.mrf.mxu0
        %v2291 = vpop.f32.mrf.mxu0
        %2292 = vdwg.mxu0
        %2293 = vmatprep.subr.bf16.mxu0 0
        %2294 = vmatpush1.bf16.msra.mxu0 0
        %2295 = vmatprep.subr.bf16.mxu0 0
        %2296 = vmatpush1.bf16.msra.mxu0 0
        %2297 = vmatprep.subr.bf16.mxu0 0
        %2298 = vmatpush1.bf16.msra.mxu0 0
        %2299 = vmatprep.subr.bf16.mxu0 0
        %2300 = vmatpush1.bf16.msra.mxu0 0
        %2301 = vmatprep.subr.bf16.mxu0 0
        %2302 = vmatpush1.bf16.msra.mxu0 0
        %2303 = vmatprep.subr.bf16.mxu0 0
        %2304 = vmatpush1.bf16.msra.mxu0 0
        %2305 = vmatprep.subr.bf16.mxu0 0
        %2306 = vmatpush1.bf16.msra.mxu0 0
        %2307 = vmatprep.subr.bf16.mxu0 %v2165
        %2308 = vmatpush1.bf16.msra.mxu0 %v2162
        %2309 = vmatprep.subr.bf16.mxu0 0
        %2310 = vmatpush2.bf16.msra.mxu0 0
        %2311 = vmatprep.subr.bf16.mxu0 0
        %2312 = vmatpush2.bf16.msra.mxu0 0
        %2313 = vmatprep.subr.bf16.mxu0 0
        %2314 = vmatpush2.bf16.msra.mxu0 0
        %2315 = vmatprep.subr.bf16.mxu0 0
        %2316 = vmatpush2.bf16.msra.mxu0 0
        %2317 = vmatprep.subr.bf16.mxu0 0
        %2318 = vmatpush2.bf16.msra.mxu0 0
        %2319 = vmatprep.subr.bf16.mxu0 0
        %2320 = vmatpush2.bf16.msra.mxu0 0
        %2321 = vmatprep.subr.bf16.mxu0 0
        %2322 = vmatpush2.bf16.msra.mxu0 0
        %2323 = vmatprep.subr.bf16.mxu0 0
        %2324 = vmatpush2.bf16.msra.mxu0 0
        %2325 = vmatprep.mubr.bf16.mxu0 0
        %2326 = vmatmul.mubr.bf16.gmra.mxu0 %v2141
        %v2327 = vpop.f32.mrf.mxu0
        %v2328 = vadd.f32 0.0, %v2327
        %v2329 = vpop.f32.mrf.mxu0
        %v2330 = vadd.f32 0.0, %v2329
        %v2331 = vpop.f32.mrf.mxu0
        %v2332 = vpop.f32.mrf.mxu0
        %2333 = vdwg.mxu0
        %2334 = vmatprep.subr.bf16.mxu0 0
        %2335 = vmatpush1.bf16.msra.mxu0 0
        %2336 = vmatprep.subr.bf16.mxu0 0
        %2337 = vmatpush1.bf16.msra.mxu0 0
        %2338 = vmatprep.subr.bf16.mxu0 0
        %2339 = vmatpush1.bf16.msra.mxu0 0
        %2340 = vmatprep.subr.bf16.mxu0 0
        %2341 = vmatpush1.bf16.msra.mxu0 0
        %2342 = vmatprep.subr.bf16.mxu0 0
        %2343 = vmatpush1.bf16.msra.mxu0 0
        %2344 = vmatprep.subr.bf16.mxu0 0
        %2345 = vmatpush1.bf16.msra.mxu0 0
        %2346 = vmatprep.subr.bf16.mxu0 0
        %2347 = vmatpush1.bf16.msra.mxu0 0
        %2348 = vmatprep.subr.bf16.mxu0 0
        %2349 = vmatpush1.bf16.msra.mxu0 %v2168
        %2350 = vmatprep.subr.bf16.mxu0 0
        %2351 = vmatpush2.bf16.msra.mxu0 0
        %2352 = vmatprep.subr.bf16.mxu0 0
        %2353 = vmatpush2.bf16.msra.mxu0 0
        %2354 = vmatprep.subr.bf16.mxu0 0
        %2355 = vmatpush2.bf16.msra.mxu0 0
        %2356 = vmatprep.subr.bf16.mxu0 0
        %2357 = vmatpush2.bf16.msra.mxu0 0
        %2358 = vmatprep.subr.bf16.mxu0 0
        %2359 = vmatpush2.bf16.msra.mxu0 0
        %2360 = vmatprep.subr.bf16.mxu0 0
        %2361 = vmatpush2.bf16.msra.mxu0 0
        %2362 = vmatprep.subr.bf16.mxu0 0
        %2363 = vmatpush2.bf16.msra.mxu0 0
        %2364 = vmatprep.subr.bf16.mxu0 0
        %2365 = vmatpush2.bf16.msra.mxu0 0
        %2366 = vmatprep.mubr.bf16.mxu0 0
        %2367 = vmatmul.mubr.bf16.gmra.mxu0 %v2141
        %v2368 = vpop.f32.mrf.mxu0
        %v2369 = vadd.f32 0.0, %v2368
        %v2370 = vpop.f32.mrf.mxu0
        %v2371 = vpop.f32.mrf.mxu0
        %v2372 = vpop.f32.mrf.mxu0
        %2373 = vdwg.mxu0
        %v2374 = vadd.f32 %v2099, %v2205
        %v2375 = vadd.f32 %v2100, %v2207
        %v2376 = vadd.f32 %v2101, %v2246
        %v2377 = vadd.f32 %v2102, %v2248
        %v2378 = vadd.f32 %v2103, %v2287
        %v2379 = vadd.f32 %v2104, %v2289
        %v2380 = vadd.f32 %v2105, %v2328
        %v2381 = vadd.f32 %v2106, %v2330
        %v2382 = vadd.f32 %v2107, %v2369
        %s2383 = scalar_lea.vmem %s1, 32
        %v2384 = vld [vmem:[%s2383] sm:$0xf]
        %2385 = vrot.lane.b32.xlu0 %v213, 58
        %v2386 = vpop.permute.xlu0 %2385
        %2387 = vrot.lane.b32.xlu0 %v221, 58
        %v2388 = vpop.permute.xlu0 %2387
        %2389 = vrot.lane.b32.xlu0 %v220, 58
        %v2390 = vpop.permute.xlu0 %2389
        %2391 = vrot.lane.b32.xlu0 %v222, 58
        %v2392 = vpop.permute.xlu0 %2391
        %2393 = vrot.lane.b32.xlu0 %v230, 58
        %v2394 = vpop.permute.xlu0 %2393
        %2395 = vrot.lane.b32.xlu0 %v238, 58
        %v2396 = vpop.permute.xlu0 %2395
        %2397 = vrot.lane.b32.xlu0 %v237, 58
        %v2398 = vpop.permute.xlu0 %2397
        %2399 = vrot.lane.b32.xlu0 %v239, 58
        %v2400 = vpop.permute.xlu0 %2399
        %2401 = vrot.lane.b32.xlu0 %v246, 58
        %v2402 = vpop.permute.xlu0 %2401
        %2403 = vrot.lane.b32.xlu0 %v1834, 58
        %v2404 = vpop.permute.xlu0 %2403
        %vm2405 = vcmask 474112
        %v2406 = vsel %vm2405, %v2386, %v2388
        %v2407 = vsel %vm2405, %v2388, %v2390
        %v2408 = vsel %vm2405, %v2390, %v2392
        %v2409 = vsel %vm2405, %v2392, %v2394
        %v2410 = vsel %vm2405, %v2394, %v2396
        %v2411 = vsel %vm2405, %v2396, %v2398
        %v2412 = vsel %vm2405, %v2398, %v2400
        %v2413 = vsel %vm2405, %v2400, %v2402
        %v2414 = vsel %vm2405, %v2402, %v2404
        %v2416 = vsel %vm274, %v2384, 0
        %v2419 = vsel %vm278, %v2406, 0
        %v2422 = vsel %vm278, %v2407, 0
        %v2425 = vsel %vm278, %v2408, 0
        %v2428 = vsel %vm278, %v2409, 0
        %v2431 = vsel %vm278, %v2410, 0
        %v2434 = vsel %vm278, %v2411, 0
        %v2437 = vsel %vm278, %v2412, 0
        %v2440 = vsel %vm278, %v2413, 0
        %v2443 = vsel %vm278, %v2414, 0
        %2445 = vmatprep.subr.bf16.mxu0 0
        %2446 = vmatpush1.bf16.msra.mxu0 0
        %2447 = vmatprep.subr.bf16.mxu0 0
        %2448 = vmatpush1.bf16.msra.mxu0 0
        %2449 = vmatprep.subr.bf16.mxu0 0
        %2450 = vmatpush1.bf16.msra.mxu0 0
        %2451 = vmatprep.subr.bf16.mxu0 0
        %2452 = vmatpush1.bf16.msra.mxu0 0
        %2453 = vmatprep.subr.bf16.mxu0 0
        %2454 = vmatpush1.bf16.msra.mxu0 0
        %2455 = vmatprep.subr.bf16.mxu0 0
        %2456 = vmatpush1.bf16.msra.mxu0 0
        %2457 = vmatprep.subr.bf16.mxu0 0
        %2458 = vmatpush1.bf16.msra.mxu0 0
        %2459 = vmatprep.subr.bf16.mxu0 %v2422
        %2460 = vmatpush1.bf16.msra.mxu0 %v2419
        %2461 = vmatprep.subr.bf16.mxu0 0
        %2462 = vmatpush2.bf16.msra.mxu0 0
        %2463 = vmatprep.subr.bf16.mxu0 0
        %2464 = vmatpush2.bf16.msra.mxu0 0
        %2465 = vmatprep.subr.bf16.mxu0 0
        %2466 = vmatpush2.bf16.msra.mxu0 0
        %2467 = vmatprep.subr.bf16.mxu0 0
        %2468 = vmatpush2.bf16.msra.mxu0 0
        %2469 = vmatprep.subr.bf16.mxu0 0
        %2470 = vmatpush2.bf16.msra.mxu0 0
        %2471 = vmatprep.subr.bf16.mxu0 0
        %2472 = vmatpush2.bf16.msra.mxu0 0
        %2473 = vmatprep.subr.bf16.mxu0 0
        %2474 = vmatpush2.bf16.msra.mxu0 0
        %2475 = vmatprep.subr.bf16.mxu0 0
        %2476 = vmatpush2.bf16.msra.mxu0 0
        %2477 = vmatprep.mubr.bf16.mxu0 0
        %2478 = vmatmul.mubr.bf16.gmra.mxu0 %v2416
        %v2479 = vpop.f32.mrf.mxu0
        %v2480 = vadd.f32 0.0, %v2479
        %v2481 = vpop.f32.mrf.mxu0
        %v2482 = vadd.f32 0.0, %v2481
        %v2483 = vpop.f32.mrf.mxu0
        %v2484 = vpop.f32.mrf.mxu0
        %2485 = vdwg.mxu0
        %2486 = vmatprep.subr.bf16.mxu0 0
        %2487 = vmatpush1.bf16.msra.mxu0 0
        %2488 = vmatprep.subr.bf16.mxu0 0
        %2489 = vmatpush1.bf16.msra.mxu0 0
        %2490 = vmatprep.subr.bf16.mxu0 0
        %2491 = vmatpush1.bf16.msra.mxu0 0
        %2492 = vmatprep.subr.bf16.mxu0 0
        %2493 = vmatpush1.bf16.msra.mxu0 0
        %2494 = vmatprep.subr.bf16.mxu0 0
        %2495 = vmatpush1.bf16.msra.mxu0 0
        %2496 = vmatprep.subr.bf16.mxu0 0
        %2497 = vmatpush1.bf16.msra.mxu0 0
        %2498 = vmatprep.subr.bf16.mxu0 0
        %2499 = vmatpush1.bf16.msra.mxu0 0
        %2500 = vmatprep.subr.bf16.mxu0 %v2428
        %2501 = vmatpush1.bf16.msra.mxu0 %v2425
        %2502 = vmatprep.subr.bf16.mxu0 0
        %2503 = vmatpush2.bf16.msra.mxu0 0
        %2504 = vmatprep.subr.bf16.mxu0 0
        %2505 = vmatpush2.bf16.msra.mxu0 0
        %2506 = vmatprep.subr.bf16.mxu0 0
        %2507 = vmatpush2.bf16.msra.mxu0 0
        %2508 = vmatprep.subr.bf16.mxu0 0
        %2509 = vmatpush2.bf16.msra.mxu0 0
        %2510 = vmatprep.subr.bf16.mxu0 0
        %2511 = vmatpush2.bf16.msra.mxu0 0
        %2512 = vmatprep.subr.bf16.mxu0 0
        %2513 = vmatpush2.bf16.msra.mxu0 0
        %2514 = vmatprep.subr.bf16.mxu0 0
        %2515 = vmatpush2.bf16.msra.mxu0 0
        %2516 = vmatprep.subr.bf16.mxu0 0
        %2517 = vmatpush2.bf16.msra.mxu0 0
        %2518 = vmatprep.mubr.bf16.mxu0 0
        %2519 = vmatmul.mubr.bf16.gmra.mxu0 %v2416
        %v2520 = vpop.f32.mrf.mxu0
        %v2521 = vadd.f32 0.0, %v2520
        %v2522 = vpop.f32.mrf.mxu0
        %v2523 = vadd.f32 0.0, %v2522
        %v2524 = vpop.f32.mrf.mxu0
        %v2525 = vpop.f32.mrf.mxu0
        %2526 = vdwg.mxu0
        %2527 = vmatprep.subr.bf16.mxu0 0
        %2528 = vmatpush1.bf16.msra.mxu0 0
        %2529 = vmatprep.subr.bf16.mxu0 0
        %2530 = vmatpush1.bf16.msra.mxu0 0
        %2531 = vmatprep.subr.bf16.mxu0 0
        %2532 = vmatpush1.bf16.msra.mxu0 0
        %2533 = vmatprep.subr.bf16.mxu0 0
        %2534 = vmatpush1.bf16.msra.mxu0 0
        %2535 = vmatprep.subr.bf16.mxu0 0
        %2536 = vmatpush1.bf16.msra.mxu0 0
        %2537 = vmatprep.subr.bf16.mxu0 0
        %2538 = vmatpush1.bf16.msra.mxu0 0
        %2539 = vmatprep.subr.bf16.mxu0 0
        %2540 = vmatpush1.bf16.msra.mxu0 0
        %2541 = vmatprep.subr.bf16.mxu0 %v2434
        %2542 = vmatpush1.bf16.msra.mxu0 %v2431
        %2543 = vmatprep.subr.bf16.mxu0 0
        %2544 = vmatpush2.bf16.msra.mxu0 0
        %2545 = vmatprep.subr.bf16.mxu0 0
        %2546 = vmatpush2.bf16.msra.mxu0 0
        %2547 = vmatprep.subr.bf16.mxu0 0
        %2548 = vmatpush2.bf16.msra.mxu0 0
        %2549 = vmatprep.subr.bf16.mxu0 0
        %2550 = vmatpush2.bf16.msra.mxu0 0
        %2551 = vmatprep.subr.bf16.mxu0 0
        %2552 = vmatpush2.bf16.msra.mxu0 0
        %2553 = vmatprep.subr.bf16.mxu0 0
        %2554 = vmatpush2.bf16.msra.mxu0 0
        %2555 = vmatprep.subr.bf16.mxu0 0
        %2556 = vmatpush2.bf16.msra.mxu0 0
        %2557 = vmatprep.subr.bf16.mxu0 0
        %2558 = vmatpush2.bf16.msra.mxu0 0
        %2559 = vmatprep.mubr.bf16.mxu0 0
        %2560 = vmatmul.mubr.bf16.gmra.mxu0 %v2416
        %v2561 = vpop.f32.mrf.mxu0
        %v2562 = vadd.f32 0.0, %v2561
        %v2563 = vpop.f32.mrf.mxu0
        %v2564 = vadd.f32 0.0, %v2563
        %v2565 = vpop.f32.mrf.mxu0
        %v2566 = vpop.f32.mrf.mxu0
        %2567 = vdwg.mxu0
        %2568 = vmatprep.subr.bf16.mxu0 0
        %2569 = vmatpush1.bf16.msra.mxu0 0
        %2570 = vmatprep.subr.bf16.mxu0 0
        %2571 = vmatpush1.bf16.msra.mxu0 0
        %2572 = vmatprep.subr.bf16.mxu0 0
        %2573 = vmatpush1.bf16.msra.mxu0 0
        %2574 = vmatprep.subr.bf16.mxu0 0
        %2575 = vmatpush1.bf16.msra.mxu0 0
        %2576 = vmatprep.subr.bf16.mxu0 0
        %2577 = vmatpush1.bf16.msra.mxu0 0
        %2578 = vmatprep.subr.bf16.mxu0 0
        %2579 = vmatpush1.bf16.msra.mxu0 0
        %2580 = vmatprep.subr.bf16.mxu0 0
        %2581 = vmatpush1.bf16.msra.mxu0 0
        %2582 = vmatprep.subr.bf16.mxu0 %v2440
        %2583 = vmatpush1.bf16.msra.mxu0 %v2437
        %2584 = vmatprep.subr.bf16.mxu0 0
        %2585 = vmatpush2.bf16.msra.mxu0 0
        %2586 = vmatprep.subr.bf16.mxu0 0
        %2587 = vmatpush2.bf16.msra.mxu0 0
        %2588 = vmatprep.subr.bf16.mxu0 0
        %2589 = vmatpush2.bf16.msra.mxu0 0
        %2590 = vmatprep.subr.bf16.mxu0 0
        %2591 = vmatpush2.bf16.msra.mxu0 0
        %2592 = vmatprep.subr.bf16.mxu0 0
        %2593 = vmatpush2.bf16.msra.mxu0 0
        %2594 = vmatprep.subr.bf16.mxu0 0
        %2595 = vmatpush2.bf16.msra.mxu0 0
        %2596 = vmatprep.subr.bf16.mxu0 0
        %2597 = vmatpush2.bf16.msra.mxu0 0
        %2598 = vmatprep.subr.bf16.mxu0 0
        %2599 = vmatpush2.bf16.msra.mxu0 0
        %2600 = vmatprep.mubr.bf16.mxu0 0
        %2601 = vmatmul.mubr.bf16.gmra.mxu0 %v2416
        %v2602 = vpop.f32.mrf.mxu0
        %v2603 = vadd.f32 0.0, %v2602
        %v2604 = vpop.f32.mrf.mxu0
        %v2605 = vadd.f32 0.0, %v2604
        %v2606 = vpop.f32.mrf.mxu0
        %v2607 = vpop.f32.mrf.mxu0
        %2608 = vdwg.mxu0
        %2609 = vmatprep.subr.bf16.mxu0 0
        %2610 = vmatpush1.bf16.msra.mxu0 0
        %2611 = vmatprep.subr.bf16.mxu0 0
        %2612 = vmatpush1.bf16.msra.mxu0 0
        %2613 = vmatprep.subr.bf16.mxu0 0
        %2614 = vmatpush1.bf16.msra.mxu0 0
        %2615 = vmatprep.subr.bf16.mxu0 0
        %2616 = vmatpush1.bf16.msra.mxu0 0
        %2617 = vmatprep.subr.bf16.mxu0 0
        %2618 = vmatpush1.bf16.msra.mxu0 0
        %2619 = vmatprep.subr.bf16.mxu0 0
        %2620 = vmatpush1.bf16.msra.mxu0 0
        %2621 = vmatprep.subr.bf16.mxu0 0
        %2622 = vmatpush1.bf16.msra.mxu0 0
        %2623 = vmatprep.subr.bf16.mxu0 0
        %2624 = vmatpush1.bf16.msra.mxu0 %v2443
        %2625 = vmatprep.subr.bf16.mxu0 0
        %2626 = vmatpush2.bf16.msra.mxu0 0
        %2627 = vmatprep.subr.bf16.mxu0 0
        %2628 = vmatpush2.bf16.msra.mxu0 0
        %2629 = vmatprep.subr.bf16.mxu0 0
        %2630 = vmatpush2.bf16.msra.mxu0 0
        %2631 = vmatprep.subr.bf16.mxu0 0
        %2632 = vmatpush2.bf16.msra.mxu0 0
        %2633 = vmatprep.subr.bf16.mxu0 0
        %2634 = vmatpush2.bf16.msra.mxu0 0
        %2635 = vmatprep.subr.bf16.mxu0 0
        %2636 = vmatpush2.bf16.msra.mxu0 0
        %2637 = vmatprep.subr.bf16.mxu0 0
        %2638 = vmatpush2.bf16.msra.mxu0 0
        %2639 = vmatprep.subr.bf16.mxu0 0
        %2640 = vmatpush2.bf16.msra.mxu0 0
        %2641 = vmatprep.mubr.bf16.mxu0 0
        %2642 = vmatmul.mubr.bf16.gmra.mxu0 %v2416
        %v2643 = vpop.f32.mrf.mxu0
        %v2644 = vadd.f32 0.0, %v2643
        %v2645 = vpop.f32.mrf.mxu0
        %v2646 = vpop.f32.mrf.mxu0
        %v2647 = vpop.f32.mrf.mxu0
        %2648 = vdwg.mxu0
        %v2649 = vadd.f32 %v2374, %v2480
        %v2650 = vadd.f32 %v2375, %v2482
        %v2651 = vadd.f32 %v2376, %v2521
        %v2652 = vadd.f32 %v2377, %v2523
        %v2653 = vadd.f32 %v2378, %v2562
        %v2654 = vadd.f32 %v2379, %v2564
        %v2655 = vadd.f32 %v2380, %v2603
        %v2656 = vadd.f32 %v2381, %v2605
        %v2657 = vadd.f32 %v2382, %v2644
        %v2658 = vld [vmem:[%s2] sm:$0xff]
        %2660 = vset.pattern.permute.xlu0 0
        %2661 = vperm.xlu0 %2660, %v2658
        %v2662 = vpop.permute.xlu0 %2661
        %v2664 = vadd.f32 %v2649, %v2662
        %v2665 = vadd.f32 %v2650, %v2662
        %v2666 = vadd.f32 %v2651, %v2662
        %v2667 = vadd.f32 %v2652, %v2662
        %v2668 = vadd.f32 %v2653, %v2662
        %v2669 = vadd.f32 %v2654, %v2662
        %v2670 = vadd.f32 %v2655, %v2662
        %v2671 = vadd.f32 %v2656, %v2662
        %v2672 = vadd.f32 %v2657, %v2662
        %v2673 = vld [vmem:[%s3] sm:$0xff]
        %v2674 = vld [vmem:[%s3 + $0x8] sm:$0x1]
        %v2677 = vlaneseq
        %v2678 = vshrl.u32 %v2677, 7
        %v2679 = vsub.s32 0, %v2678
        %v2680 = vrot.slane %v2673, %v2679
        %v2681 = vlaneseq
        %v2682 = vshrl.u32 %v2681, 7
        %v2683 = vsub.s32 1, %v2682
        %v2684 = vrot.slane %v2673, %v2683
        %v2685 = vlaneseq
        %v2686 = vshrl.u32 %v2685, 7
        %v2687 = vsub.s32 2, %v2686
        %v2688 = vrot.slane %v2673, %v2687
        %v2689 = vlaneseq
        %v2690 = vshrl.u32 %v2689, 7
        %v2691 = vsub.s32 3, %v2690
        %v2692 = vrot.slane %v2673, %v2691
        %v2693 = vlaneseq
        %v2694 = vshrl.u32 %v2693, 7
        %v2695 = vsub.s32 4, %v2694
        %v2696 = vrot.slane %v2673, %v2695
        %v2697 = vlaneseq
        %v2698 = vshrl.u32 %v2697, 7
        %v2699 = vsub.s32 5, %v2698
        %v2700 = vrot.slane %v2673, %v2699
        %v2701 = vlaneseq
        %v2702 = vshrl.u32 %v2701, 7
        %v2703 = vsub.s32 6, %v2702
        %v2704 = vrot.slane %v2673, %v2703
        %v2705 = vlaneseq
        %v2706 = vshrl.u32 %v2705, 7
        %v2707 = vsub.s32 7, %v2706
        %v2708 = vrot.slane %v2673, %v2707
        %v2709 = vlaneseq
        %v2710 = vshrl.u32 %v2709, 7
        %v2711 = vsub.s32 0, %v2710
        %v2712 = vrot.slane %v2674, %v2711
        %v2722 = vmul.f32 %v2664, %v2680
        %v2723 = vmul.f32 %v2665, %v2684
        %v2724 = vmul.f32 %v2666, %v2688
        %v2725 = vmul.f32 %v2667, %v2692
        %v2726 = vmul.f32 %v2668, %v2696
        %v2727 = vmul.f32 %v2669, %v2700
        %v2728 = vmul.f32 %v2670, %v2704
        %v2729 = vmul.f32 %v2671, %v2708
        %v2730 = vmul.f32 %v2672, %v2712
        %v2731 = vadd.f32 %v2722, %v2723
        %v2732 = vadd.f32 %v2731, %v2724
        %v2733 = vadd.f32 %v2732, %v2725
        %v2734 = vadd.f32 %v2733, %v2726
        %v2735 = vadd.f32 %v2734, %v2727
        %v2736 = vadd.f32 %v2735, %v2728
        %v2737 = vadd.f32 %v2736, %v2729
        %vm2738 = vcmask 523264
        %v2739 = vsel %vm2738, %v2730, 0.0
        %v2740 = vadd.f32 %v2737, %v2739
        %2741 = vadd.xlane.f32.xlu0 %v2740
        %v2742 = vpop.xlane.xlu0 %2741
        %v2743 = vmul.f32 %v2742, 0.0009765625
        %v2744 = vsub.f32 %v2664, %v2743
        %v2745 = vsub.f32 %v2665, %v2743
        %v2746 = vsub.f32 %v2666, %v2743
        %v2747 = vsub.f32 %v2667, %v2743
        %v2748 = vsub.f32 %v2668, %v2743
        %v2749 = vsub.f32 %v2669, %v2743
        %v2750 = vsub.f32 %v2670, %v2743
        %v2751 = vsub.f32 %v2671, %v2743
        %v2752 = vsub.f32 %v2672, %v2743
        %v2753 = vmul.f32 %v2744, %v2680
        %v2754 = vmul.f32 %v2745, %v2684
        %v2755 = vmul.f32 %v2746, %v2688
        %v2756 = vmul.f32 %v2747, %v2692
        %v2757 = vmul.f32 %v2748, %v2696
        %v2758 = vmul.f32 %v2749, %v2700
        %v2759 = vmul.f32 %v2750, %v2704
        %v2760 = vmul.f32 %v2751, %v2708
        %v2761 = vmul.f32 %v2752, %v2712
        %v2762 = vmul.f32 %v2753, %v2753
        %v2763 = vmul.f32 %v2754, %v2754
        %v2764 = vmul.f32 %v2755, %v2755
        %v2765 = vmul.f32 %v2756, %v2756
        %v2766 = vmul.f32 %v2757, %v2757
        %v2767 = vmul.f32 %v2758, %v2758
        %v2768 = vmul.f32 %v2759, %v2759
        %v2769 = vmul.f32 %v2760, %v2760
        %v2770 = vmul.f32 %v2761, %v2761
        %v2771 = vadd.f32 %v2762, %v2763
        %v2772 = vadd.f32 %v2771, %v2764
        %v2773 = vadd.f32 %v2772, %v2765
        %v2774 = vadd.f32 %v2773, %v2766
        %v2775 = vadd.f32 %v2774, %v2767
        %v2776 = vadd.f32 %v2775, %v2768
        %v2777 = vadd.f32 %v2776, %v2769
        %v2778 = vsel %vm2738, %v2770, 0.0
        %v2779 = vadd.f32 %v2777, %v2778
        %2780 = vadd.xlane.f32.xlu0 %v2779
        %v2781 = vpop.xlane.xlu0 %2780
        %v2782 = vmul.f32 %v2781, 0.0009765625
        %v2783 = vadd.f32 %v2782, 1e-05
        %v2784 = vrsqrt.pop %v2783
        %v2785 = vmul.f32 %v2784, %v2658
        %2787 = vset.pattern.permute.xlu0 1
        %2788 = vperm.xlu0 %2787, %v2785
        %v2789 = vpop.permute.xlu0 %2788
        %v2791 = vmul.f32 %v2744, %v2789
        %v2792 = vmul.f32 %v2745, %v2789
        %v2793 = vmul.f32 %v2746, %v2789
        %v2794 = vmul.f32 %v2747, %v2789
        %v2795 = vmul.f32 %v2748, %v2789
        %v2796 = vmul.f32 %v2749, %v2789
        %v2797 = vmul.f32 %v2750, %v2789
        %v2798 = vmul.f32 %v2751, %v2789
        %v2799 = vmul.f32 %v2752, %v2789
        %2800 = vset.pattern.permute.xlu0 2
        %2801 = vperm.xlu0 %2800, %v2658
        %v2802 = vpop.permute.xlu0 %2801
        %v2804 = vadd.f32 %v2791, %v2802
        %v2805 = vadd.f32 %v2792, %v2802
        %v2806 = vadd.f32 %v2793, %v2802
        %v2807 = vadd.f32 %v2794, %v2802
        %v2808 = vadd.f32 %v2795, %v2802
        %v2809 = vadd.f32 %v2796, %v2802
        %v2810 = vadd.f32 %v2797, %v2802
        %v2811 = vadd.f32 %v2798, %v2802
        %v2812 = vadd.f32 %v2799, %v2802
        %v2813 = vmax.f32 %v2804, 0.0
        %v2814 = vmax.f32 %v2805, 0.0
        %v2815 = vmax.f32 %v2806, 0.0
        %v2816 = vmax.f32 %v2807, 0.0
        %v2817 = vmax.f32 %v2808, 0.0
        %v2818 = vmax.f32 %v2809, 0.0
        %v2819 = vmax.f32 %v2810, 0.0
        %v2820 = vmax.f32 %v2811, 0.0
        %v2821 = vmax.f32 %v2812, 0.0
        %2822 = vst [vmem:[%s190] sm:$0xff] %v2813
        %2823 = vst [vmem:[%s190 + $0x8] sm:$0xff] %v2814
        %2824 = vst [vmem:[%s190 + $0x10] sm:$0xff] %v2815
        %2825 = vst [vmem:[%s190 + $0x18] sm:$0xff] %v2816
        %2826 = vst [vmem:[%s190 + $0x20] sm:$0xff] %v2817
        %2827 = vst [vmem:[%s190 + $0x28] sm:$0xff] %v2818
        %2828 = vst [vmem:[%s190 + $0x30] sm:$0xff] %v2819
        %2829 = vst [vmem:[%s190 + $0x38] sm:$0xff] %v2820
        %2830 = vst.msk [vmem:[%s190 + $0x40] sm:$0xff] %vm2738, %v2821
        %s2831 = sand.u32 %s115, 1
        %s2832 = scalar_lea.sflag [#allocation3], %s2831
        %s2833 = sand.u32 %s115, 1
        %s2834 = smul.addr %s2833, 72
        %s2835 = scalar_lea.vmem [#allocation2], %s2834
        // Predicated region
        $region37: #{tpu_custom_call.1} parent=35 // pred_check
          %p2836 = pneg %p125
        $region38: #{tpu_custom_call.1} parent=35 // pred_check_branch
          %2838 = sbr.rel (%p2836) target = $region40
        $region39: #{tpu_custom_call.1} parent=35 // pred_region
          %s2840 = ssub.s32 1152, 1152
          %2841 = vsyncadd %s2832, %s2840
          %s2842 = smul.addr %s18, 9
          %s2843 = smul.addr %s2842, 128
          %s2844 = scalar_lea.hbm %s4, %s2843
          %s2846 = sshll.u32 %s2835, 4
          %s2847 = int_to_ptr.vmem [resolvable:$true] %s2846
          %2849 = dma.vmem_to_hbm [thread:$0]  %s2847, 1152, %s2844, %s2832
        $region40: #{tpu_custom_call.1} parent=35 // pred_fallthru
          _
      $region36: #{tpu_custom_call.1} parent=5 // pred_fallthru
        _
      %p2850 = scmp.le.s32.totalorder 2, %s13
      // Predicated region
      $region41: #{tpu_custom_call.1} parent=5 // pred_check
        %p2851 = pneg %p2850
      $region42: #{tpu_custom_call.1} parent=5 // pred_check_branch
        %2853 = sbr.rel (%p2851) target = $region44
      $region43: #{tpu_custom_call.1} parent=5 // pred_region
        %s2854 = ssub.s32 %s13, 2
        // Predicated region
        $region45: #{tpu_custom_call.1} parent=43 // pred_check
          %p2855 = pneg %p131
        $region46: #{tpu_custom_call.1} parent=43 // pred_check_branch
          %2857 = sbr.rel (%p2855) target = $region48
        $region47: #{tpu_custom_call.1} parent=43 // pred_region
          %s2858 = sand.u32 %s116, 1
          %s2859 = scalar_lea.sflag [#allocation3], %s2858
          %s2860 = sand.u32 %s116, 1
          %s2861 = smul.addr %s2860, 72
          %s2862 = scalar_lea.vmem [#allocation2], %s2861
          %2863 = dma.done %s2859, 1152
        $region48: #{tpu_custom_call.1} parent=43 // pred_fallthru
          _
      $region44: #{tpu_custom_call.1} parent=5 // pred_fallthru
        _
    $region6: #{tpu_custom_call.1} parent=1 // loop_footer
      %s17 = sadd.s32 1, %s13
    $region7: #{tpu_custom_call.1} parent=1 // loop_footer_branch
      %12 = sbr.rel target = $region3
    $region8: #{tpu_custom_call.1} parent=1 // loop_exit
      _
    %2864 = vsyncpa [#allocation3], 1
    %s2865 = scalar_lea.sflag [#allocation3], 1
    %2866 = vsyncpa %s2865, 1

</llo_original>
